<compile_context>
chip_gen: v7x
topology: tpu7x:2x2x1
jax: 0.10.0
libtpu: 0.0.40
codegen_flags: <defaults>
</compile_context>

<pallas_src>
import jax
import jax.numpy as jnp
from jax import lax
from jax.experimental import pallas as pl
from jax.experimental.pallas import tpu as pltpu
import numpy as np

# ---------------------------------------------------------------------------
# Problem sizes (small, consistent with the module's forward)
# ---------------------------------------------------------------------------
BATCH = 2          # batch size
SEQ = 8            # source sequence length
EMBED = 32         # args.embed
HIDDEN = 32        # args.hidden
VOCAB_COUNT = 50   # vocab.count
UNK_ID = 1         # vocab.w2i['<UNK>']


# ---------------------------------------------------------------------------
# Pallas kernel: fused bidirectional GRU, single invocation
# ---------------------------------------------------------------------------
def bigru_kernel(emb_ref, wih_ref, whh_ref, bproj_ref, bhhn_ref, out_ref):
  """Fused bidirectional GRU.

  emb_ref:   (T*B, E)   time-major embeddings (row t*B + b = x[t, b])
  wih_ref:   (E, 6H)    [fwd r|z|n | bwd r|z|n] input-projection weights
  whh_ref:   (2H, 6H)   block-diagonal recurrent weights
  bproj_ref: (1, 6H)    bih + [bhh_r, bhh_z, 0]  (per direction)
  bhhn_ref:  (1, 2H)    [bhh_n_fwd | bhh_n_bwd]  (stays inside the r* term)
  out_ref:   (B, T*2H)  out[:, t*2H : t*2H+H] = fwd_t, [t*2H+H : (t+1)*2H] = bwd_t
  """
  TB, _ = emb_ref.shape
  H = whh_ref.shape[0] // 2
  B = out_ref.shape[0]
  T = TB // B

  # Hoisted, non-recurrent input projection: one wide MXU matmul + bias.
  gi_all = (jnp.dot(emb_ref[...], wih_ref[...],
                    preferred_element_type=jnp.float32)
            + bproj_ref[...])                                   # (T*B, 6H)

  whh = whh_ref[...]                                            # (2H, 6H)
  bhh_n = bhhn_ref[...]                                         # (1, 2H)

  def gate(gi, gh, bn, h):
    # PyTorch GRU cell semantics (r|z|n gate order).
    r = jax.nn.sigmoid(gi[:, 0:H] + gh[:, 0:H])
    z = jax.nn.sigmoid(gi[:, H:2 * H] + gh[:, H:2 * H])
    n = jnp.tanh(gi[:, 2 * H:3 * H] + r * (gh[:, 2 * H:3 * H] + bn))
    return (1.0 - z) * n + z * h

  h_cat = jnp.zeros((B, 2 * H), jnp.float32)                    # [h_fwd | h_bwd]

  # Fully unrolled time loop (T small & static) -> static slices everywhere.
  for t in range(T):
    # Single recurrent matmul per step for both directions (block-diag whh).
    gh = jnp.dot(h_cat, whh, preferred_element_type=jnp.float32)  # (B, 6H)
    gi_f = gi_all[t * B:(t + 1) * B, 0:3 * H]                     # x[t]
    gi_b = gi_all[(T - 1 - t) * B:(T - t) * B, 3 * H:6 * H]       # x[T-1-t]

    h_f = gate(gi_f, gh[:, 0:3 * H], bhh_n[:, 0:H], h_cat[:, 0:H])
    h_b = gate(gi_b, gh[:, 3 * H:6 * H], bhh_n[:, H:2 * H], h_cat[:, H:2 * H])
    h_cat = jnp.concatenate([h_f, h_b], axis=-1)

    # Write directly in the final (B, T, 2H) layout (flattened to T*2H lanes).
    out_ref[:, t * 2 * H:t * 2 * H + H] = h_f
    out_ref[:, (T - 1 - t) * 2 * H + H:(T - t) * 2 * H] = h_b


def bidirectional_gru_pallas(emb_bte, gru_params):
  """emb_bte: (B, T, E) float32  ->  (B, T, 2H) float32."""
  B, T, E = emb_bte.shape
  H = HIDDEN
  (wih_f, whh_f, bih_f, bhh_f, wih_b, whh_b, bih_b, bhh_b) = gru_params

  # Time-major, flattened rows for the single hoisted projection matmul.
  emb_2d = jnp.transpose(emb_bte, (1, 0, 2)).reshape(T * B, E)

  # Fused weight layout: [fwd r|z|n | bwd r|z|n] along the gate axis.
  wih_cat = jnp.concatenate([wih_f, wih_b], axis=-1)            # (E, 6H)
  whh_blk = jnp.zeros((2 * H, 6 * H), jnp.float32)
  whh_blk = whh_blk.at[:H, :3 * H].set(whh_f)
  whh_blk = whh_blk.at[H:, 3 * H:].set(whh_b)                   # (2H, 6H)

  def fold_bias(bih, bhh):   # fold bih + bhh for r,z; n keeps only bih here.
    return bih + jnp.concatenate(
        [bhh[:, :2 * H], jnp.zeros((1, H), jnp.float32)], axis=-1)

  bproj = jnp.concatenate([fold_bias(bih_f, bhh_f),
                           fold_bias(bih_b, bhh_b)], axis=-1)   # (1, 6H)
  bhh_n = jnp.concatenate([bhh_f[:, 2 * H:], bhh_b[:, 2 * H:]],
                          axis=-1)                              # (1, 2H)

  vmem = pl.BlockSpec(memory_space=pltpu.MemorySpace.VMEM)
  out = pl.pallas_call(
      bigru_kernel,
      out_shape=jax.ShapeDtypeStruct((B, T * 2 * H), jnp.float32),
      in_specs=[vmem] * 5,
      out_specs=vmem,
  )(emb_2d, wih_cat, whh_blk, bproj, bhh_n)

  return out.reshape(B, T, 2 * H)   # free row-major reshape


# ---------------------------------------------------------------------------
# CopyNet forward (glue in plain JAX; GRU in Pallas)
# ---------------------------------------------------------------------------
def unk_tensor(tok):
  return jnp.where(tok >= VOCAB_COUNT, jnp.int32(UNK_ID), tok)


@jax.jit
def copynet_forward(sources, targets, embedding, gru_params):
  unked_sources = unk_tensor(sources)
  unked_targets = unk_tensor(targets)
  embedded_sources = embedding[unked_sources]          # (B, T, E)
  _embedded_targets = embedding[unked_targets]         # consumed by decoder
  encoded_sources = bidirectional_gru_pallas(embedded_sources, gru_params)
  # TODO(synk): CopyDecoder source was not provided; return encoder states.
  return encoded_sources


# ---------------------------------------------------------------------------
# Pure-JAX reference (lax.scan GRU) used only for a correctness assert
# ---------------------------------------------------------------------------
def _gru_cell_ref(x, h, wih, whh, bih, bhh):
  hsz = h.shape[-1]
  gi = jnp.dot(x, wih, preferred_element_type=jnp.float32) + bih
  gh = jnp.dot(h, whh, preferred_element_type=jnp.float32) + bhh
  r = jax.nn.sigmoid(gi[:, :hsz] + gh[:, :hsz])
  z = jax.nn.sigmoid(gi[:, hsz:2 * hsz] + gh[:, hsz:2 * hsz])
  n = jnp.tanh(gi[:, 2 * hsz:] + r * gh[:, 2 * hsz:])
  return (1.0 - z) * n + z * h


def gru_direction_ref(emb_bte, wih, whh, bih, bhh, reverse):
  B = emb_bte.shape[0]
  xs = jnp.transpose(emb_bte, (1, 0, 2))   # (T, B, E)
  if reverse:
    xs = xs[::-1]

  def cell(h, x):
    h_new = _gru_cell_ref(x, h, wih, whh, bih, bhh)
    return h_new, h_new

  h0 = jnp.zeros((B, HIDDEN), jnp.float32)
  _, ys = lax.scan(cell, h0, xs)
  if reverse:
    ys = ys[::-1]
  return jnp.transpose(ys, (1, 0, 2))      # (B, T, H)


def copynet_forward_ref(sources, embedding, gru_params):
  (wih_f, whh_f, bih_f, bhh_f, wih_b, whh_b, bih_b, bhh_b) = gru_params
  emb = embedding[unk_tensor(sources)]
  fwd = gru_direction_ref(emb, wih_f, whh_f, bih_f, bhh_f, reverse=False)
  bwd = gru_direction_ref(emb, wih_b, whh_b, bih_b, bhh_b, reverse=True)
  return jnp.concatenate([fwd, bwd], axis=-1)


# ---------------------------------------------------------------------------
# Deterministic parameter init
# ---------------------------------------------------------------------------
def make_params(key):
  keys = jax.random.split(key, 9)
  scale = 1.0 / np.sqrt(HIDDEN)
  u = lambda k, shape: jax.random.uniform(
      k, shape, jnp.float32, minval=-scale, maxval=scale)
  embedding = jax.random.normal(keys[0], (VOCAB_COUNT, EMBED), jnp.float32)
  wih_f = u(keys[1], (EMBED, 3 * HIDDEN))
  whh_f = u(keys[2], (HIDDEN, 3 * HIDDEN))
  bih_f = u(keys[3], (1, 3 * HIDDEN))
  bhh_f = u(keys[4], (1, 3 * HIDDEN))
  wih_b = u(keys[5], (EMBED, 3 * HIDDEN))
  whh_b = u(keys[6], (HIDDEN, 3 * HIDDEN))
  bih_b = u(keys[7], (1, 3 * HIDDEN))
  bhh_b = u(keys[8], (1, 3 * HIDDEN))
  return embedding, (wih_f, whh_f, bih_f, bhh_f, wih_b, whh_b, bih_b, bhh_b)


if __name__ == "__main__":
  key = jax.random.PRNGKey(0)
  k_emb, k_src, k_tgt = jax.random.split(key, 3)
  embedding, gru_params = make_params(k_emb)

  # Token ids intentionally drawn above VOCAB_COUNT to exercise unk masking.
  sources = jax.random.randint(k_src, (BATCH, SEQ), 0, VOCAB_COUNT + 10,
                               dtype=jnp.int32)
  targets = jax.random.randint(k_tgt, (BATCH, SEQ), 0, VOCAB_COUNT + 10,
                               dtype=jnp.int32)

  out = copynet_forward(sources, targets, embedding, gru_params)
  out = jax.block_until_ready(out)

  ref = jax.block_until_ready(
      copynet_forward_ref(sources, embedding, gru_params))
  np.testing.assert_allclose(np.asarray(out), np.asarray(ref),
                             rtol=1e-4, atol=1e-5)

  print("KERNEL_OK")
</pallas_src>

<mosaic_0001>
module attributes {stable_mosaic.version = 11 : i64} {
  func.func @bigru_kernel(%arg0: memref<16x32xf32, #tpu.memory_space<vmem>>, %arg1: memref<32x192xf32, #tpu.memory_space<vmem>>, %arg2: memref<64x192xf32, #tpu.memory_space<vmem>>, %arg3: memref<1x192xf32, #tpu.memory_space<vmem>>, %arg4: memref<1x64xf32, #tpu.memory_space<vmem>>, %arg5: memref<2x512xf32, #tpu.memory_space<vmem>>) attributes {dimension_semantics = [], scalar_prefetch = 0 : i64, scratch_operands = 0 : i64, tpu.core_type = #tpu.core_type<tc>} {
    %c0 = arith.constant 0 : index
    %c0_0 = arith.constant 0 : index
    %0 = vector.load %arg0[%c0, %c0_0] : memref<16x32xf32, #tpu.memory_space<vmem>>, vector<16x32xf32>
    %c0_1 = arith.constant 0 : index
    %c0_2 = arith.constant 0 : index
    %1 = vector.load %arg1[%c0_1, %c0_2] : memref<32x192xf32, #tpu.memory_space<vmem>>, vector<32x192xf32>
    %cst = arith.constant dense<0.000000e+00> : vector<16x192xf32>
    %2 = tpu.matmul %0, %1, %cst {dimension_numbers = #tpu.dot_dimension_numbers<[1], [0], [0], [1], [0, 0, 1, 1], [], []>} : vector<16x32xf32>, vector<32x192xf32>, vector<16x192xf32> -> vector<16x192xf32>
    %c0_3 = arith.constant 0 : index
    %c0_4 = arith.constant 0 : index
    %3 = vector.load %arg3[%c0_3, %c0_4] : memref<1x192xf32, #tpu.memory_space<vmem>>, vector<1x192xf32>
    %4 = vector.broadcast %3 : vector<1x192xf32> to vector<16x192xf32>
    %5 = arith.addf %2, %4 : vector<16x192xf32>
    %c0_5 = arith.constant 0 : index
    %c0_6 = arith.constant 0 : index
    %6 = vector.load %arg2[%c0_5, %c0_6] : memref<64x192xf32, #tpu.memory_space<vmem>>, vector<64x192xf32>
    %c0_7 = arith.constant 0 : index
    %c0_8 = arith.constant 0 : index
    %7 = vector.load %arg4[%c0_7, %c0_8] : memref<1x64xf32, #tpu.memory_space<vmem>>, vector<1x64xf32>
    %cst_9 = arith.constant 0.000000e+00 : f32
    %8 = vector.broadcast %cst_9 : f32 to vector<2x64xf32>
    %cst_10 = arith.constant dense<0.000000e+00> : vector<2x192xf32>
    %9 = tpu.matmul %8, %6, %cst_10 {dimension_numbers = #tpu.dot_dimension_numbers<[1], [0], [0], [1], [0, 0, 1, 1], [], []>} : vector<2x64xf32>, vector<64x192xf32>, vector<2x192xf32> -> vector<2x192xf32>
    %10 = vector.extract_strided_slice %5 {offsets = [0, 0], sizes = [2, 96], strides = [1, 1]} : vector<16x192xf32> to vector<2x96xf32>
    %11 = vector.extract_strided_slice %5 {offsets = [14, 96], sizes = [2, 96], strides = [1, 1]} : vector<16x192xf32> to vector<2x96xf32>
    %12 = vector.extract_strided_slice %9 {offsets = [0, 0], sizes = [2, 96], strides = [1, 1]} : vector<2x192xf32> to vector<2x96xf32>
    %13 = vector.extract_strided_slice %7 {offsets = [0, 0], sizes = [1, 32], strides = [1, 1]} : vector<1x64xf32> to vector<1x32xf32>
    %14 = vector.extract_strided_slice %8 {offsets = [0, 0], sizes = [2, 32], strides = [1, 1]} : vector<2x64xf32> to vector<2x32xf32>
    %15 = vector.extract_strided_slice %10 {offsets = [0, 0], sizes = [2, 32], strides = [1, 1]} : vector<2x96xf32> to vector<2x32xf32>
    %16 = vector.extract_strided_slice %12 {offsets = [0, 0], sizes = [2, 32], strides = [1, 1]} : vector<2x96xf32> to vector<2x32xf32>
    %17 = arith.addf %15, %16 : vector<2x32xf32>
    %18 = arith.negf %17 : vector<2x32xf32>
    %19 = math.exp %18 : vector<2x32xf32>
    %cst_11 = arith.constant 1.000000e+00 : f32
    %20 = vector.broadcast %cst_11 : f32 to vector<2x32xf32>
    %21 = arith.addf %20, %19 : vector<2x32xf32>
    %22 = arith.divf %20, %21 : vector<2x32xf32>
    %23 = vector.extract_strided_slice %10 {offsets = [0, 32], sizes = [2, 32], strides = [1, 1]} : vector<2x96xf32> to vector<2x32xf32>
    %24 = vector.extract_strided_slice %12 {offsets = [0, 32], sizes = [2, 32], strides = [1, 1]} : vector<2x96xf32> to vector<2x32xf32>
    %25 = arith.addf %23, %24 : vector<2x32xf32>
    %26 = arith.negf %25 : vector<2x32xf32>
    %27 = math.exp %26 : vector<2x32xf32>
    %cst_12 = arith.constant 1.000000e+00 : f32
    %28 = vector.broadcast %cst_12 : f32 to vector<2x32xf32>
    %29 = arith.addf %28, %27 : vector<2x32xf32>
    %30 = arith.divf %28, %29 : vector<2x32xf32>
    %31 = vector.extract_strided_slice %10 {offsets = [0, 64], sizes = [2, 32], strides = [1, 1]} : vector<2x96xf32> to vector<2x32xf32>
    %32 = vector.extract_strided_slice %12 {offsets = [0, 64], sizes = [2, 32], strides = [1, 1]} : vector<2x96xf32> to vector<2x32xf32>
    %33 = vector.broadcast %13 : vector<1x32xf32> to vector<2x32xf32>
    %34 = arith.addf %32, %33 : vector<2x32xf32>
    %35 = arith.mulf %22, %34 : vector<2x32xf32>
    %36 = arith.addf %31, %35 : vector<2x32xf32>
    %37 = math.tanh %36 : vector<2x32xf32>
    %cst_13 = arith.constant 1.000000e+00 : f32
    %38 = vector.broadcast %cst_13 : f32 to vector<2x32xf32>
    %39 = arith.subf %38, %30 : vector<2x32xf32>
    %40 = arith.mulf %39, %37 : vector<2x32xf32>
    %41 = arith.mulf %30, %14 : vector<2x32xf32>
    %42 = arith.addf %40, %41 : vector<2x32xf32>
    %43 = vector.extract_strided_slice %9 {offsets = [0, 96], sizes = [2, 96], strides = [1, 1]} : vector<2x192xf32> to vector<2x96xf32>
    %44 = vector.extract_strided_slice %7 {offsets = [0, 32], sizes = [1, 32], strides = [1, 1]} : vector<1x64xf32> to vector<1x32xf32>
    %45 = vector.extract_strided_slice %8 {offsets = [0, 32], sizes = [2, 32], strides = [1, 1]} : vector<2x64xf32> to vector<2x32xf32>
    %46 = vector.extract_strided_slice %11 {offsets = [0, 0], sizes = [2, 32], strides = [1, 1]} : vector<2x96xf32> to vector<2x32xf32>
    %47 = vector.extract_strided_slice %43 {offsets = [0, 0], sizes = [2, 32], strides = [1, 1]} : vector<2x96xf32> to vector<2x32xf32>
    %48 = arith.addf %46, %47 : vector<2x32xf32>
    %49 = arith.negf %48 : vector<2x32xf32>
    %50 = math.exp %49 : vector<2x32xf32>
    %cst_14 = arith.constant 1.000000e+00 : f32
    %51 = vector.broadcast %cst_14 : f32 to vector<2x32xf32>
    %52 = arith.addf %51, %50 : vector<2x32xf32>
    %53 = arith.divf %51, %52 : vector<2x32xf32>
    %54 = vector.extract_strided_slice %11 {offsets = [0, 32], sizes = [2, 32], strides = [1, 1]} : vector<2x96xf32> to vector<2x32xf32>
    %55 = vector.extract_strided_slice %43 {offsets = [0, 32], sizes = [2, 32], strides = [1, 1]} : vector<2x96xf32> to vector<2x32xf32>
    %56 = arith.addf %54, %55 : vector<2x32xf32>
    %57 = arith.negf %56 : vector<2x32xf32>
    %58 = math.exp %57 : vector<2x32xf32>
    %cst_15 = arith.constant 1.000000e+00 : f32
    %59 = vector.broadcast %cst_15 : f32 to vector<2x32xf32>
    %60 = arith.addf %59, %58 : vector<2x32xf32>
    %61 = arith.divf %59, %60 : vector<2x32xf32>
    %62 = vector.extract_strided_slice %11 {offsets = [0, 64], sizes = [2, 32], strides = [1, 1]} : vector<2x96xf32> to vector<2x32xf32>
    %63 = vector.extract_strided_slice %43 {offsets = [0, 64], sizes = [2, 32], strides = [1, 1]} : vector<2x96xf32> to vector<2x32xf32>
    %64 = vector.broadcast %44 : vector<1x32xf32> to vector<2x32xf32>
    %65 = arith.addf %63, %64 : vector<2x32xf32>
    %66 = arith.mulf %53, %65 : vector<2x32xf32>
    %67 = arith.addf %62, %66 : vector<2x32xf32>
    %68 = math.tanh %67 : vector<2x32xf32>
    %cst_16 = arith.constant 1.000000e+00 : f32
    %69 = vector.broadcast %cst_16 : f32 to vector<2x32xf32>
    %70 = arith.subf %69, %61 : vector<2x32xf32>
    %71 = arith.mulf %70, %68 : vector<2x32xf32>
    %72 = arith.mulf %61, %45 : vector<2x32xf32>
    %73 = arith.addf %71, %72 : vector<2x32xf32>
    %74 = tpu.concatenate %42, %73 in 1 : vector<2x32xf32>, vector<2x32xf32> -> vector<2x64xf32>
    %c0_17 = arith.constant 0 : index
    %c0_18 = arith.constant 0 : index
    %75 = vector.load %arg5[%c0_17, %c0_18] : memref<2x512xf32, #tpu.memory_space<vmem>>, vector<2x32xf32>
    tpu.vector_store %arg5[%c0_17, %c0_18], %42 {strides = array<i32>} : memref<2x512xf32, #tpu.memory_space<vmem>>, vector<2x32xf32>,
    %c0_19 = arith.constant 0 : index
    %c480 = arith.constant 480 : index
    %76 = vector.load %arg5[%c0_19, %c480] : memref<2x512xf32, #tpu.memory_space<vmem>>, vector<2x32xf32>
    tpu.vector_store %arg5[%c0_19, %c480], %73 {strides = array<i32>} : memref<2x512xf32, #tpu.memory_space<vmem>>, vector<2x32xf32>,
    %cst_20 = arith.constant dense<0.000000e+00> : vector<2x192xf32>
    %77 = tpu.matmul %74, %6, %cst_20 {dimension_numbers = #tpu.dot_dimension_numbers<[1], [0], [0], [1], [0, 0, 1, 1], [], []>} : vector<2x64xf32>, vector<64x192xf32>, vector<2x192xf32> -> vector<2x192xf32>
    %78 = vector.extract_strided_slice %5 {offsets = [2, 0], sizes = [2, 96], strides = [1, 1]} : vector<16x192xf32> to vector<2x96xf32>
    %79 = vector.extract_strided_slice %5 {offsets = [12, 96], sizes = [2, 96], strides = [1, 1]} : vector<16x192xf32> to vector<2x96xf32>
    %80 = vector.extract_strided_slice %77 {offsets = [0, 0], sizes = [2, 96], strides = [1, 1]} : vector<2x192xf32> to vector<2x96xf32>
    %81 = vector.extract_strided_slice %7 {offsets = [0, 0], sizes = [1, 32], strides = [1, 1]} : vector<1x64xf32> to vector<1x32xf32>
    %82 = vector.extract_strided_slice %74 {offsets = [0, 0], sizes = [2, 32], strides = [1, 1]} : vector<2x64xf32> to vector<2x32xf32>
    %83 = vector.extract_strided_slice %78 {offsets = [0, 0], sizes = [2, 32], strides = [1, 1]} : vector<2x96xf32> to vector<2x32xf32>
    %84 = vector.extract_strided_slice %80 {offsets = [0, 0], sizes = [2, 32], strides = [1, 1]} : vector<2x96xf32> to vector<2x32xf32>
    %85 = arith.addf %83, %84 : vector<2x32xf32>
    %86 = arith.negf %85 : vector<2x32xf32>
    %87 = math.exp %86 : vector<2x32xf32>
    %cst_21 = arith.constant 1.000000e+00 : f32
    %88 = vector.broadcast %cst_21 : f32 to vector<2x32xf32>
    %89 = arith.addf %88, %87 : vector<2x32xf32>
    %90 = arith.divf %88, %89 : vector<2x32xf32>
    %91 = vector.extract_strided_slice %78 {offsets = [0, 32], sizes = [2, 32], strides = [1, 1]} : vector<2x96xf32> to vector<2x32xf32>
    %92 = vector.extract_strided_slice %80 {offsets = [0, 32], sizes = [2, 32], strides = [1, 1]} : vector<2x96xf32> to vector<2x32xf32>
    %93 = arith.addf %91, %92 : vector<2x32xf32>
    %94 = arith.negf %93 : vector<2x32xf32>
    %95 = math.exp %94 : vector<2x32xf32>
    %cst_22 = arith.constant 1.000000e+00 : f32
    %96 = vector.broadcast %cst_22 : f32 to vector<2x32xf32>
    %97 = arith.addf %96, %95 : vector<2x32xf32>
    %98 = arith.divf %96, %97 : vector<2x32xf32>
    %99 = vector.extract_strided_slice %78 {offsets = [0, 64], sizes = [2, 32], strides = [1, 1]} : vector<2x96xf32> to vector<2x32xf32>
    %100 = vector.extract_strided_slice %80 {offsets = [0, 64], sizes = [2, 32], strides = [1, 1]} : vector<2x96xf32> to vector<2x32xf32>
    %101 = vector.broadcast %81 : vector<1x32xf32> to vector<2x32xf32>
    %102 = arith.addf %100, %101 : vector<2x32xf32>
    %103 = arith.mulf %90, %102 : vector<2x32xf32>
    %104 = arith.addf %99, %103 : vector<2x32xf32>
    %105 = math.tanh %104 : vector<2x32xf32>
    %cst_23 = arith.constant 1.000000e+00 : f32
    %106 = vector.broadcast %cst_23 : f32 to vector<2x32xf32>
    %107 = arith.subf %106, %98 : vector<2x32xf32>
    %108 = arith.mulf %107, %105 : vector<2x32xf32>
    %109 = arith.mulf %98, %82 : vector<2x32xf32>
    %110 = arith.addf %108, %109 : vector<2x32xf32>
    %111 = vector.extract_strided_slice %77 {offsets = [0, 96], sizes = [2, 96], strides = [1, 1]} : vector<2x192xf32> to vector<2x96xf32>
    %112 = vector.extract_strided_slice %7 {offsets = [0, 32], sizes = [1, 32], strides = [1, 1]} : vector<1x64xf32> to vector<1x32xf32>
    %113 = vector.extract_strided_slice %74 {offsets = [0, 32], sizes = [2, 32], strides = [1, 1]} : vector<2x64xf32> to vector<2x32xf32>
    %114 = vector.extract_strided_slice %79 {offsets = [0, 0], sizes = [2, 32], strides = [1, 1]} : vector<2x96xf32> to vector<2x32xf32>
    %115 = vector.extract_strided_slice %111 {offsets = [0, 0], sizes = [2, 32], strides = [1, 1]} : vector<2x96xf32> to vector<2x32xf32>
    %116 = arith.addf %114, %115 : vector<2x32xf32>
    %117 = arith.negf %116 : vector<2x32xf32>
    %118 = math.exp %117 : vector<2x32xf32>
    %cst_24 = arith.constant 1.000000e+00 : f32
    %119 = vector.broadcast %cst_24 : f32 to vector<2x32xf32>
    %120 = arith.addf %119, %118 : vector<2x32xf32>
    %121 = arith.divf %119, %120 : vector<2x32xf32>
    %122 = vector.extract_strided_slice %79 {offsets = [0, 32], sizes = [2, 32], strides = [1, 1]} : vector<2x96xf32> to vector<2x32xf32>
    %123 = vector.extract_strided_slice %111 {offsets = [0, 32], sizes = [2, 32], strides = [1, 1]} : vector<2x96xf32> to vector<2x32xf32>
    %124 = arith.addf %122, %123 : vector<2x32xf32>
    %125 = arith.negf %124 : vector<2x32xf32>
    %126 = math.exp %125 : vector<2x32xf32>
    %cst_25 = arith.constant 1.000000e+00 : f32
    %127 = vector.broadcast %cst_25 : f32 to vector<2x32xf32>
    %128 = arith.addf %127, %126 : vector<2x32xf32>
    %129 = arith.divf %127, %128 : vector<2x32xf32>
    %130 = vector.extract_strided_slice %79 {offsets = [0, 64], sizes = [2, 32], strides = [1, 1]} : vector<2x96xf32> to vector<2x32xf32>
    %131 = vector.extract_strided_slice %111 {offsets = [0, 64], sizes = [2, 32], strides = [1, 1]} : vector<2x96xf32> to vector<2x32xf32>
    %132 = vector.broadcast %112 : vector<1x32xf32> to vector<2x32xf32>
    %133 = arith.addf %131, %132 : vector<2x32xf32>
    %134 = arith.mulf %121, %133 : vector<2x32xf32>
    %135 = arith.addf %130, %134 : vector<2x32xf32>
    %136 = math.tanh %135 : vector<2x32xf32>
    %cst_26 = arith.constant 1.000000e+00 : f32
    %137 = vector.broadcast %cst_26 : f32 to vector<2x32xf32>
    %138 = arith.subf %137, %129 : vector<2x32xf32>
    %139 = arith.mulf %138, %136 : vector<2x32xf32>
    %140 = arith.mulf %129, %113 : vector<2x32xf32>
    %141 = arith.addf %139, %140 : vector<2x32xf32>
    %142 = tpu.concatenate %110, %141 in 1 : vector<2x32xf32>, vector<2x32xf32> -> vector<2x64xf32>
    %c0_27 = arith.constant 0 : index
    %c64 = arith.constant 64 : index
    %143 = vector.load %arg5[%c0_27, %c64] : memref<2x512xf32, #tpu.memory_space<vmem>>, vector<2x32xf32>
    tpu.vector_store %arg5[%c0_27, %c64], %110 {strides = array<i32>} : memref<2x512xf32, #tpu.memory_space<vmem>>, vector<2x32xf32>,
    %c0_28 = arith.constant 0 : index
    %c416 = arith.constant 416 : index
    %144 = vector.load %arg5[%c0_28, %c416] : memref<2x512xf32, #tpu.memory_space<vmem>>, vector<2x32xf32>
    tpu.vector_store %arg5[%c0_28, %c416], %141 {strides = array<i32>} : memref<2x512xf32, #tpu.memory_space<vmem>>, vector<2x32xf32>,
    %cst_29 = arith.constant dense<0.000000e+00> : vector<2x192xf32>
    %145 = tpu.matmul %142, %6, %cst_29 {dimension_numbers = #tpu.dot_dimension_numbers<[1], [0], [0], [1], [0, 0, 1, 1], [], []>} : vector<2x64xf32>, vector<64x192xf32>, vector<2x192xf32> -> vector<2x192xf32>
    %146 = vector.extract_strided_slice %5 {offsets = [4, 0], sizes = [2, 96], strides = [1, 1]} : vector<16x192xf32> to vector<2x96xf32>
    %147 = vector.extract_strided_slice %5 {offsets = [10, 96], sizes = [2, 96], strides = [1, 1]} : vector<16x192xf32> to vector<2x96xf32>
    %148 = vector.extract_strided_slice %145 {offsets = [0, 0], sizes = [2, 96], strides = [1, 1]} : vector<2x192xf32> to vector<2x96xf32>
    %149 = vector.extract_strided_slice %7 {offsets = [0, 0], sizes = [1, 32], strides = [1, 1]} : vector<1x64xf32> to vector<1x32xf32>
    %150 = vector.extract_strided_slice %142 {offsets = [0, 0], sizes = [2, 32], strides = [1, 1]} : vector<2x64xf32> to vector<2x32xf32>
    %151 = vector.extract_strided_slice %146 {offsets = [0, 0], sizes = [2, 32], strides = [1, 1]} : vector<2x96xf32> to vector<2x32xf32>
    %152 = vector.extract_strided_slice %148 {offsets = [0, 0], sizes = [2, 32], strides = [1, 1]} : vector<2x96xf32> to vector<2x32xf32>
    %153 = arith.addf %151, %152 : vector<2x32xf32>
    %154 = arith.negf %153 : vector<2x32xf32>
    %155 = math.exp %154 : vector<2x32xf32>
    %cst_30 = arith.constant 1.000000e+00 : f32
    %156 = vector.broadcast %cst_30 : f32 to vector<2x32xf32>
    %157 = arith.addf %156, %155 : vector<2x32xf32>
    %158 = arith.divf %156, %157 : vector<2x32xf32>
    %159 = vector.extract_strided_slice %146 {offsets = [0, 32], sizes = [2, 32], strides = [1, 1]} : vector<2x96xf32> to vector<2x32xf32>
    %160 = vector.extract_strided_slice %148 {offsets = [0, 32], sizes = [2, 32], strides = [1, 1]} : vector<2x96xf32> to vector<2x32xf32>
    %161 = arith.addf %159, %160 : vector<2x32xf32>
    %162 = arith.negf %161 : vector<2x32xf32>
    %163 = math.exp %162 : vector<2x32xf32>
    %cst_31 = arith.constant 1.000000e+00 : f32
    %164 = vector.broadcast %cst_31 : f32 to vector<2x32xf32>
    %165 = arith.addf %164, %163 : vector<2x32xf32>
    %166 = arith.divf %164, %165 : vector<2x32xf32>
    %167 = vector.extract_strided_slice %146 {offsets = [0, 64], sizes = [2, 32], strides = [1, 1]} : vector<2x96xf32> to vector<2x32xf32>
    %168 = vector.extract_strided_slice %148 {offsets = [0, 64], sizes = [2, 32], strides = [1, 1]} : vector<2x96xf32> to vector<2x32xf32>
    %169 = vector.broadcast %149 : vector<1x32xf32> to vector<2x32xf32>
    %170 = arith.addf %168, %169 : vector<2x32xf32>
    %171 = arith.mulf %158, %170 : vector<2x32xf32>
    %172 = arith.addf %167, %171 : vector<2x32xf32>
    %173 = math.tanh %172 : vector<2x32xf32>
    %cst_32 = arith.constant 1.000000e+00 : f32
    %174 = vector.broadcast %cst_32 : f32 to vector<2x32xf32>
    %175 = arith.subf %174, %166 : vector<2x32xf32>
    %176 = arith.mulf %175, %173 : vector<2x32xf32>
    %177 = arith.mulf %166, %150 : vector<2x32xf32>
    %178 = arith.addf %176, %177 : vector<2x32xf32>
    %179 = vector.extract_strided_slice %145 {offsets = [0, 96], sizes = [2, 96], strides = [1, 1]} : vector<2x192xf32> to vector<2x96xf32>
    %180 = vector.extract_strided_slice %7 {offsets = [0, 32], sizes = [1, 32], strides = [1, 1]} : vector<1x64xf32> to vector<1x32xf32>
    %181 = vector.extract_strided_slice %142 {offsets = [0, 32], sizes = [2, 32], strides = [1, 1]} : vector<2x64xf32> to vector<2x32xf32>
    %182 = vector.extract_strided_slice %147 {offsets = [0, 0], sizes = [2, 32], strides = [1, 1]} : vector<2x96xf32> to vector<2x32xf32>
    %183 = vector.extract_strided_slice %179 {offsets = [0, 0], sizes = [2, 32], strides = [1, 1]} : vector<2x96xf32> to vector<2x32xf32>
    %184 = arith.addf %182, %183 : vector<2x32xf32>
    %185 = arith.negf %184 : vector<2x32xf32>
    %186 = math.exp %185 : vector<2x32xf32>
    %cst_33 = arith.constant 1.000000e+00 : f32
    %187 = vector.broadcast %cst_33 : f32 to vector<2x32xf32>
    %188 = arith.addf %187, %186 : vector<2x32xf32>
    %189 = arith.divf %187, %188 : vector<2x32xf32>
    %190 = vector.extract_strided_slice %147 {offsets = [0, 32], sizes = [2, 32], strides = [1, 1]} : vector<2x96xf32> to vector<2x32xf32>
    %191 = vector.extract_strided_slice %179 {offsets = [0, 32], sizes = [2, 32], strides = [1, 1]} : vector<2x96xf32> to vector<2x32xf32>
    %192 = arith.addf %190, %191 : vector<2x32xf32>
    %193 = arith.negf %192 : vector<2x32xf32>
    %194 = math.exp %193 : vector<2x32xf32>
    %cst_34 = arith.constant 1.000000e+00 : f32
    %195 = vector.broadcast %cst_34 : f32 to vector<2x32xf32>
    %196 = arith.addf %195, %194 : vector<2x32xf32>
    %197 = arith.divf %195, %196 : vector<2x32xf32>
    %198 = vector.extract_strided_slice %147 {offsets = [0, 64], sizes = [2, 32], strides = [1, 1]} : vector<2x96xf32> to vector<2x32xf32>
    %199 = vector.extract_strided_slice %179 {offsets = [0, 64], sizes = [2, 32], strides = [1, 1]} : vector<2x96xf32> to vector<2x32xf32>
    %200 = vector.broadcast %180 : vector<1x32xf32> to vector<2x32xf32>
    %201 = arith.addf %199, %200 : vector<2x32xf32>
    %202 = arith.mulf %189, %201 : vector<2x32xf32>
    %203 = arith.addf %198, %202 : vector<2x32xf32>
    %204 = math.tanh %203 : vector<2x32xf32>
    %cst_35 = arith.constant 1.000000e+00 : f32
    %205 = vector.broadcast %cst_35 : f32 to vector<2x32xf32>
    %206 = arith.subf %205, %197 : vector<2x32xf32>
    %207 = arith.mulf %206, %204 : vector<2x32xf32>
    %208 = arith.mulf %197, %181 : vector<2x32xf32>
    %209 = arith.addf %207, %208 : vector<2x32xf32>
    %210 = tpu.concatenate %178, %209 in 1 : vector<2x32xf32>, vector<2x32xf32> -> vector<2x64xf32>
    %c0_36 = arith.constant 0 : index
    %c128 = arith.constant 128 : index
    %211 = vector.load %arg5[%c0_36, %c128] : memref<2x512xf32, #tpu.memory_space<vmem>>, vector<2x32xf32>
    tpu.vector_store %arg5[%c0_36, %c128], %178 {strides = array<i32>} : memref<2x512xf32, #tpu.memory_space<vmem>>, vector<2x32xf32>,
    %c0_37 = arith.constant 0 : index
    %c352 = arith.constant 352 : index
    %212 = vector.load %arg5[%c0_37, %c352] : memref<2x512xf32, #tpu.memory_space<vmem>>, vector<2x32xf32>
    tpu.vector_store %arg5[%c0_37, %c352], %209 {strides = array<i32>} : memref<2x512xf32, #tpu.memory_space<vmem>>, vector<2x32xf32>,
    %cst_38 = arith.constant dense<0.000000e+00> : vector<2x192xf32>
    %213 = tpu.matmul %210, %6, %cst_38 {dimension_numbers = #tpu.dot_dimension_numbers<[1], [0], [0], [1], [0, 0, 1, 1], [], []>} : vector<2x64xf32>, vector<64x192xf32>, vector<2x192xf32> -> vector<2x192xf32>
    %214 = vector.extract_strided_slice %5 {offsets = [6, 0], sizes = [2, 96], strides = [1, 1]} : vector<16x192xf32> to vector<2x96xf32>
    %215 = vector.extract_strided_slice %5 {offsets = [8, 96], sizes = [2, 96], strides = [1, 1]} : vector<16x192xf32> to vector<2x96xf32>
    %216 = vector.extract_strided_slice %213 {offsets = [0, 0], sizes = [2, 96], strides = [1, 1]} : vector<2x192xf32> to vector<2x96xf32>
    %217 = vector.extract_strided_slice %7 {offsets = [0, 0], sizes = [1, 32], strides = [1, 1]} : vector<1x64xf32> to vector<1x32xf32>
    %218 = vector.extract_strided_slice %210 {offsets = [0, 0], sizes = [2, 32], strides = [1, 1]} : vector<2x64xf32> to vector<2x32xf32>
    %219 = vector.extract_strided_slice %214 {offsets = [0, 0], sizes = [2, 32], strides = [1, 1]} : vector<2x96xf32> to vector<2x32xf32>
    %220 = vector.extract_strided_slice %216 {offsets = [0, 0], sizes = [2, 32], strides = [1, 1]} : vector<2x96xf32> to vector<2x32xf32>
    %221 = arith.addf %219, %220 : vector<2x32xf32>
    %222 = arith.negf %221 : vector<2x32xf32>
    %223 = math.exp %222 : vector<2x32xf32>
    %cst_39 = arith.constant 1.000000e+00 : f32
    %224 = vector.broadcast %cst_39 : f32 to vector<2x32xf32>
    %225 = arith.addf %224, %223 : vector<2x32xf32>
    %226 = arith.divf %224, %225 : vector<2x32xf32>
    %227 = vector.extract_strided_slice %214 {offsets = [0, 32], sizes = [2, 32], strides = [1, 1]} : vector<2x96xf32> to vector<2x32xf32>
    %228 = vector.extract_strided_slice %216 {offsets = [0, 32], sizes = [2, 32], strides = [1, 1]} : vector<2x96xf32> to vector<2x32xf32>
    %229 = arith.addf %227, %228 : vector<2x32xf32>
    %230 = arith.negf %229 : vector<2x32xf32>
    %231 = math.exp %230 : vector<2x32xf32>
    %cst_40 = arith.constant 1.000000e+00 : f32
    %232 = vector.broadcast %cst_40 : f32 to vector<2x32xf32>
    %233 = arith.addf %232, %231 : vector<2x32xf32>
    %234 = arith.divf %232, %233 : vector<2x32xf32>
    %235 = vector.extract_strided_slice %214 {offsets = [0, 64], sizes = [2, 32], strides = [1, 1]} : vector<2x96xf32> to vector<2x32xf32>
    %236 = vector.extract_strided_slice %216 {offsets = [0, 64], sizes = [2, 32], strides = [1, 1]} : vector<2x96xf32> to vector<2x32xf32>
    %237 = vector.broadcast %217 : vector<1x32xf32> to vector<2x32xf32>
    %238 = arith.addf %236, %237 : vector<2x32xf32>
    %239 = arith.mulf %226, %238 : vector<2x32xf32>
    %240 = arith.addf %235, %239 : vector<2x32xf32>
    %241 = math.tanh %240 : vector<2x32xf32>
    %cst_41 = arith.constant 1.000000e+00 : f32
    %242 = vector.broadcast %cst_41 : f32 to vector<2x32xf32>
    %243 = arith.subf %242, %234 : vector<2x32xf32>
    %244 = arith.mulf %243, %241 : vector<2x32xf32>
    %245 = arith.mulf %234, %218 : vector<2x32xf32>
    %246 = arith.addf %244, %245 : vector<2x32xf32>
    %247 = vector.extract_strided_slice %213 {offsets = [0, 96], sizes = [2, 96], strides = [1, 1]} : vector<2x192xf32> to vector<2x96xf32>
    %248 = vector.extract_strided_slice %7 {offsets = [0, 32], sizes = [1, 32], strides = [1, 1]} : vector<1x64xf32> to vector<1x32xf32>
    %249 = vector.extract_strided_slice %210 {offsets = [0, 32], sizes = [2, 32], strides = [1, 1]} : vector<2x64xf32> to vector<2x32xf32>
    %250 = vector.extract_strided_slice %215 {offsets = [0, 0], sizes = [2, 32], strides = [1, 1]} : vector<2x96xf32> to vector<2x32xf32>
    %251 = vector.extract_strided_slice %247 {offsets = [0, 0], sizes = [2, 32], strides = [1, 1]} : vector<2x96xf32> to vector<2x32xf32>
    %252 = arith.addf %250, %251 : vector<2x32xf32>
    %253 = arith.negf %252 : vector<2x32xf32>
    %254 = math.exp %253 : vector<2x32xf32>
    %cst_42 = arith.constant 1.000000e+00 : f32
    %255 = vector.broadcast %cst_42 : f32 to vector<2x32xf32>
    %256 = arith.addf %255, %254 : vector<2x32xf32>
    %257 = arith.divf %255, %256 : vector<2x32xf32>
    %258 = vector.extract_strided_slice %215 {offsets = [0, 32], sizes = [2, 32], strides = [1, 1]} : vector<2x96xf32> to vector<2x32xf32>
    %259 = vector.extract_strided_slice %247 {offsets = [0, 32], sizes = [2, 32], strides = [1, 1]} : vector<2x96xf32> to vector<2x32xf32>
    %260 = arith.addf %258, %259 : vector<2x32xf32>
    %261 = arith.negf %260 : vector<2x32xf32>
    %262 = math.exp %261 : vector<2x32xf32>
    %cst_43 = arith.constant 1.000000e+00 : f32
    %263 = vector.broadcast %cst_43 : f32 to vector<2x32xf32>
    %264 = arith.addf %263, %262 : vector<2x32xf32>
    %265 = arith.divf %263, %264 : vector<2x32xf32>
    %266 = vector.extract_strided_slice %215 {offsets = [0, 64], sizes = [2, 32], strides = [1, 1]} : vector<2x96xf32> to vector<2x32xf32>
    %267 = vector.extract_strided_slice %247 {offsets = [0, 64], sizes = [2, 32], strides = [1, 1]} : vector<2x96xf32> to vector<2x32xf32>
    %268 = vector.broadcast %248 : vector<1x32xf32> to vector<2x32xf32>
    %269 = arith.addf %267, %268 : vector<2x32xf32>
    %270 = arith.mulf %257, %269 : vector<2x32xf32>
    %271 = arith.addf %266, %270 : vector<2x32xf32>
    %272 = math.tanh %271 : vector<2x32xf32>
    %cst_44 = arith.constant 1.000000e+00 : f32
    %273 = vector.broadcast %cst_44 : f32 to vector<2x32xf32>
    %274 = arith.subf %273, %265 : vector<2x32xf32>
    %275 = arith.mulf %274, %272 : vector<2x32xf32>
    %276 = arith.mulf %265, %249 : vector<2x32xf32>
    %277 = arith.addf %275, %276 : vector<2x32xf32>
    %278 = tpu.concatenate %246, %277 in 1 : vector<2x32xf32>, vector<2x32xf32> -> vector<2x64xf32>
    %c0_45 = arith.constant 0 : index
    %c192 = arith.constant 192 : index
    %279 = vector.load %arg5[%c0_45, %c192] : memref<2x512xf32, #tpu.memory_space<vmem>>, vector<2x32xf32>
    tpu.vector_store %arg5[%c0_45, %c192], %246 {strides = array<i32>} : memref<2x512xf32, #tpu.memory_space<vmem>>, vector<2x32xf32>,
    %c0_46 = arith.constant 0 : index
    %c288 = arith.constant 288 : index
    %280 = vector.load %arg5[%c0_46, %c288] : memref<2x512xf32, #tpu.memory_space<vmem>>, vector<2x32xf32>
    tpu.vector_store %arg5[%c0_46, %c288], %277 {strides = array<i32>} : memref<2x512xf32, #tpu.memory_space<vmem>>, vector<2x32xf32>,
    %cst_47 = arith.constant dense<0.000000e+00> : vector<2x192xf32>
    %281 = tpu.matmul %278, %6, %cst_47 {dimension_numbers = #tpu.dot_dimension_numbers<[1], [0], [0], [1], [0, 0, 1, 1], [], []>} : vector<2x64xf32>, vector<64x192xf32>, vector<2x192xf32> -> vector<2x192xf32>
    %282 = vector.extract_strided_slice %5 {offsets = [8, 0], sizes = [2, 96], strides = [1, 1]} : vector<16x192xf32> to vector<2x96xf32>
    %283 = vector.extract_strided_slice %5 {offsets = [6, 96], sizes = [2, 96], strides = [1, 1]} : vector<16x192xf32> to vector<2x96xf32>
    %284 = vector.extract_strided_slice %281 {offsets = [0, 0], sizes = [2, 96], strides = [1, 1]} : vector<2x192xf32> to vector<2x96xf32>
    %285 = vector.extract_strided_slice %7 {offsets = [0, 0], sizes = [1, 32], strides = [1, 1]} : vector<1x64xf32> to vector<1x32xf32>
    %286 = vector.extract_strided_slice %278 {offsets = [0, 0], sizes = [2, 32], strides = [1, 1]} : vector<2x64xf32> to vector<2x32xf32>
    %287 = vector.extract_strided_slice %282 {offsets = [0, 0], sizes = [2, 32], strides = [1, 1]} : vector<2x96xf32> to vector<2x32xf32>
    %288 = vector.extract_strided_slice %284 {offsets = [0, 0], sizes = [2, 32], strides = [1, 1]} : vector<2x96xf32> to vector<2x32xf32>
    %289 = arith.addf %287, %288 : vector<2x32xf32>
    %290 = arith.negf %289 : vector<2x32xf32>
    %291 = math.exp %290 : vector<2x32xf32>
    %cst_48 = arith.constant 1.000000e+00 : f32
    %292 = vector.broadcast %cst_48 : f32 to vector<2x32xf32>
    %293 = arith.addf %292, %291 : vector<2x32xf32>
    %294 = arith.divf %292, %293 : vector<2x32xf32>
    %295 = vector.extract_strided_slice %282 {offsets = [0, 32], sizes = [2, 32], strides = [1, 1]} : vector<2x96xf32> to vector<2x32xf32>
    %296 = vector.extract_strided_slice %284 {offsets = [0, 32], sizes = [2, 32], strides = [1, 1]} : vector<2x96xf32> to vector<2x32xf32>
    %297 = arith.addf %295, %296 : vector<2x32xf32>
    %298 = arith.negf %297 : vector<2x32xf32>
    %299 = math.exp %298 : vector<2x32xf32>
    %cst_49 = arith.constant 1.000000e+00 : f32
    %300 = vector.broadcast %cst_49 : f32 to vector<2x32xf32>
    %301 = arith.addf %300, %299 : vector<2x32xf32>
    %302 = arith.divf %300, %301 : vector<2x32xf32>
    %303 = vector.extract_strided_slice %282 {offsets = [0, 64], sizes = [2, 32], strides = [1, 1]} : vector<2x96xf32> to vector<2x32xf32>
    %304 = vector.extract_strided_slice %284 {offsets = [0, 64], sizes = [2, 32], strides = [1, 1]} : vector<2x96xf32> to vector<2x32xf32>
    %305 = vector.broadcast %285 : vector<1x32xf32> to vector<2x32xf32>
    %306 = arith.addf %304, %305 : vector<2x32xf32>
    %307 = arith.mulf %294, %306 : vector<2x32xf32>
    %308 = arith.addf %303, %307 : vector<2x32xf32>
    %309 = math.tanh %308 : vector<2x32xf32>
    %cst_50 = arith.constant 1.000000e+00 : f32
    %310 = vector.broadcast %cst_50 : f32 to vector<2x32xf32>
    %311 = arith.subf %310, %302 : vector<2x32xf32>
    %312 = arith.mulf %311, %309 : vector<2x32xf32>
    %313 = arith.mulf %302, %286 : vector<2x32xf32>
    %314 = arith.addf %312, %313 : vector<2x32xf32>
    %315 = vector.extract_strided_slice %281 {offsets = [0, 96], sizes = [2, 96], strides = [1, 1]} : vector<2x192xf32> to vector<2x96xf32>
    %316 = vector.extract_strided_slice %7 {offsets = [0, 32], sizes = [1, 32], strides = [1, 1]} : vector<1x64xf32> to vector<1x32xf32>
    %317 = vector.extract_strided_slice %278 {offsets = [0, 32], sizes = [2, 32], strides = [1, 1]} : vector<2x64xf32> to vector<2x32xf32>
    %318 = vector.extract_strided_slice %283 {offsets = [0, 0], sizes = [2, 32], strides = [1, 1]} : vector<2x96xf32> to vector<2x32xf32>
    %319 = vector.extract_strided_slice %315 {offsets = [0, 0], sizes = [2, 32], strides = [1, 1]} : vector<2x96xf32> to vector<2x32xf32>
    %320 = arith.addf %318, %319 : vector<2x32xf32>
    %321 = arith.negf %320 : vector<2x32xf32>
    %322 = math.exp %321 : vector<2x32xf32>
    %cst_51 = arith.constant 1.000000e+00 : f32
    %323 = vector.broadcast %cst_51 : f32 to vector<2x32xf32>
    %324 = arith.addf %323, %322 : vector<2x32xf32>
    %325 = arith.divf %323, %324 : vector<2x32xf32>
    %326 = vector.extract_strided_slice %283 {offsets = [0, 32], sizes = [2, 32], strides = [1, 1]} : vector<2x96xf32> to vector<2x32xf32>
    %327 = vector.extract_strided_slice %315 {offsets = [0, 32], sizes = [2, 32], strides = [1, 1]} : vector<2x96xf32> to vector<2x32xf32>
    %328 = arith.addf %326, %327 : vector<2x32xf32>
    %329 = arith.negf %328 : vector<2x32xf32>
    %330 = math.exp %329 : vector<2x32xf32>
    %cst_52 = arith.constant 1.000000e+00 : f32
    %331 = vector.broadcast %cst_52 : f32 to vector<2x32xf32>
    %332 = arith.addf %331, %330 : vector<2x32xf32>
    %333 = arith.divf %331, %332 : vector<2x32xf32>
    %334 = vector.extract_strided_slice %283 {offsets = [0, 64], sizes = [2, 32], strides = [1, 1]} : vector<2x96xf32> to vector<2x32xf32>
    %335 = vector.extract_strided_slice %315 {offsets = [0, 64], sizes = [2, 32], strides = [1, 1]} : vector<2x96xf32> to vector<2x32xf32>
    %336 = vector.broadcast %316 : vector<1x32xf32> to vector<2x32xf32>
    %337 = arith.addf %335, %336 : vector<2x32xf32>
    %338 = arith.mulf %325, %337 : vector<2x32xf32>
    %339 = arith.addf %334, %338 : vector<2x32xf32>
    %340 = math.tanh %339 : vector<2x32xf32>
    %cst_53 = arith.constant 1.000000e+00 : f32
    %341 = vector.broadcast %cst_53 : f32 to vector<2x32xf32>
    %342 = arith.subf %341, %333 : vector<2x32xf32>
    %343 = arith.mulf %342, %340 : vector<2x32xf32>
    %344 = arith.mulf %333, %317 : vector<2x32xf32>
    %345 = arith.addf %343, %344 : vector<2x32xf32>
    %346 = tpu.concatenate %314, %345 in 1 : vector<2x32xf32>, vector<2x32xf32> -> vector<2x64xf32>
    %c0_54 = arith.constant 0 : index
    %c256 = arith.constant 256 : index
    %347 = vector.load %arg5[%c0_54, %c256] : memref<2x512xf32, #tpu.memory_space<vmem>>, vector<2x32xf32>
    tpu.vector_store %arg5[%c0_54, %c256], %314 {strides = array<i32>} : memref<2x512xf32, #tpu.memory_space<vmem>>, vector<2x32xf32>,
    %c0_55 = arith.constant 0 : index
    %c224 = arith.constant 224 : index
    %348 = vector.load %arg5[%c0_55, %c224] : memref<2x512xf32, #tpu.memory_space<vmem>>, vector<2x32xf32>
    tpu.vector_store %arg5[%c0_55, %c224], %345 {strides = array<i32>} : memref<2x512xf32, #tpu.memory_space<vmem>>, vector<2x32xf32>,
    %cst_56 = arith.constant dense<0.000000e+00> : vector<2x192xf32>
    %349 = tpu.matmul %346, %6, %cst_56 {dimension_numbers = #tpu.dot_dimension_numbers<[1], [0], [0], [1], [0, 0, 1, 1], [], []>} : vector<2x64xf32>, vector<64x192xf32>, vector<2x192xf32> -> vector<2x192xf32>
    %350 = vector.extract_strided_slice %5 {offsets = [10, 0], sizes = [2, 96], strides = [1, 1]} : vector<16x192xf32> to vector<2x96xf32>
    %351 = vector.extract_strided_slice %5 {offsets = [4, 96], sizes = [2, 96], strides = [1, 1]} : vector<16x192xf32> to vector<2x96xf32>
    %352 = vector.extract_strided_slice %349 {offsets = [0, 0], sizes = [2, 96], strides = [1, 1]} : vector<2x192xf32> to vector<2x96xf32>
    %353 = vector.extract_strided_slice %7 {offsets = [0, 0], sizes = [1, 32], strides = [1, 1]} : vector<1x64xf32> to vector<1x32xf32>
    %354 = vector.extract_strided_slice %346 {offsets = [0, 0], sizes = [2, 32], strides = [1, 1]} : vector<2x64xf32> to vector<2x32xf32>
    %355 = vector.extract_strided_slice %350 {offsets = [0, 0], sizes = [2, 32], strides = [1, 1]} : vector<2x96xf32> to vector<2x32xf32>
    %356 = vector.extract_strided_slice %352 {offsets = [0, 0], sizes = [2, 32], strides = [1, 1]} : vector<2x96xf32> to vector<2x32xf32>
    %357 = arith.addf %355, %356 : vector<2x32xf32>
    %358 = arith.negf %357 : vector<2x32xf32>
    %359 = math.exp %358 : vector<2x32xf32>
    %cst_57 = arith.constant 1.000000e+00 : f32
    %360 = vector.broadcast %cst_57 : f32 to vector<2x32xf32>
    %361 = arith.addf %360, %359 : vector<2x32xf32>
    %362 = arith.divf %360, %361 : vector<2x32xf32>
    %363 = vector.extract_strided_slice %350 {offsets = [0, 32], sizes = [2, 32], strides = [1, 1]} : vector<2x96xf32> to vector<2x32xf32>
    %364 = vector.extract_strided_slice %352 {offsets = [0, 32], sizes = [2, 32], strides = [1, 1]} : vector<2x96xf32> to vector<2x32xf32>
    %365 = arith.addf %363, %364 : vector<2x32xf32>
    %366 = arith.negf %365 : vector<2x32xf32>
    %367 = math.exp %366 : vector<2x32xf32>
    %cst_58 = arith.constant 1.000000e+00 : f32
    %368 = vector.broadcast %cst_58 : f32 to vector<2x32xf32>
    %369 = arith.addf %368, %367 : vector<2x32xf32>
    %370 = arith.divf %368, %369 : vector<2x32xf32>
    %371 = vector.extract_strided_slice %350 {offsets = [0, 64], sizes = [2, 32], strides = [1, 1]} : vector<2x96xf32> to vector<2x32xf32>
    %372 = vector.extract_strided_slice %352 {offsets = [0, 64], sizes = [2, 32], strides = [1, 1]} : vector<2x96xf32> to vector<2x32xf32>
    %373 = vector.broadcast %353 : vector<1x32xf32> to vector<2x32xf32>
    %374 = arith.addf %372, %373 : vector<2x32xf32>
    %375 = arith.mulf %362, %374 : vector<2x32xf32>
    %376 = arith.addf %371, %375 : vector<2x32xf32>
    %377 = math.tanh %376 : vector<2x32xf32>
    %cst_59 = arith.constant 1.000000e+00 : f32
    %378 = vector.broadcast %cst_59 : f32 to vector<2x32xf32>
    %379 = arith.subf %378, %370 : vector<2x32xf32>
    %380 = arith.mulf %379, %377 : vector<2x32xf32>
    %381 = arith.mulf %370, %354 : vector<2x32xf32>
    %382 = arith.addf %380, %381 : vector<2x32xf32>
    %383 = vector.extract_strided_slice %349 {offsets = [0, 96], sizes = [2, 96], strides = [1, 1]} : vector<2x192xf32> to vector<2x96xf32>
    %384 = vector.extract_strided_slice %7 {offsets = [0, 32], sizes = [1, 32], strides = [1, 1]} : vector<1x64xf32> to vector<1x32xf32>
    %385 = vector.extract_strided_slice %346 {offsets = [0, 32], sizes = [2, 32], strides = [1, 1]} : vector<2x64xf32> to vector<2x32xf32>
    %386 = vector.extract_strided_slice %351 {offsets = [0, 0], sizes = [2, 32], strides = [1, 1]} : vector<2x96xf32> to vector<2x32xf32>
    %387 = vector.extract_strided_slice %383 {offsets = [0, 0], sizes = [2, 32], strides = [1, 1]} : vector<2x96xf32> to vector<2x32xf32>
    %388 = arith.addf %386, %387 : vector<2x32xf32>
    %389 = arith.negf %388 : vector<2x32xf32>
    %390 = math.exp %389 : vector<2x32xf32>
    %cst_60 = arith.constant 1.000000e+00 : f32
    %391 = vector.broadcast %cst_60 : f32 to vector<2x32xf32>
    %392 = arith.addf %391, %390 : vector<2x32xf32>
    %393 = arith.divf %391, %392 : vector<2x32xf32>
    %394 = vector.extract_strided_slice %351 {offsets = [0, 32], sizes = [2, 32], strides = [1, 1]} : vector<2x96xf32> to vector<2x32xf32>
    %395 = vector.extract_strided_slice %383 {offsets = [0, 32], sizes = [2, 32], strides = [1, 1]} : vector<2x96xf32> to vector<2x32xf32>
    %396 = arith.addf %394, %395 : vector<2x32xf32>
    %397 = arith.negf %396 : vector<2x32xf32>
    %398 = math.exp %397 : vector<2x32xf32>
    %cst_61 = arith.constant 1.000000e+00 : f32
    %399 = vector.broadcast %cst_61 : f32 to vector<2x32xf32>
    %400 = arith.addf %399, %398 : vector<2x32xf32>
    %401 = arith.divf %399, %400 : vector<2x32xf32>
    %402 = vector.extract_strided_slice %351 {offsets = [0, 64], sizes = [2, 32], strides = [1, 1]} : vector<2x96xf32> to vector<2x32xf32>
    %403 = vector.extract_strided_slice %383 {offsets = [0, 64], sizes = [2, 32], strides = [1, 1]} : vector<2x96xf32> to vector<2x32xf32>
    %404 = vector.broadcast %384 : vector<1x32xf32> to vector<2x32xf32>
    %405 = arith.addf %403, %404 : vector<2x32xf32>
    %406 = arith.mulf %393, %405 : vector<2x32xf32>
    %407 = arith.addf %402, %406 : vector<2x32xf32>
    %408 = math.tanh %407 : vector<2x32xf32>
    %cst_62 = arith.constant 1.000000e+00 : f32
    %409 = vector.broadcast %cst_62 : f32 to vector<2x32xf32>
    %410 = arith.subf %409, %401 : vector<2x32xf32>
    %411 = arith.mulf %410, %408 : vector<2x32xf32>
    %412 = arith.mulf %401, %385 : vector<2x32xf32>
    %413 = arith.addf %411, %412 : vector<2x32xf32>
    %414 = tpu.concatenate %382, %413 in 1 : vector<2x32xf32>, vector<2x32xf32> -> vector<2x64xf32>
    %c0_63 = arith.constant 0 : index
    %c320 = arith.constant 320 : index
    %415 = vector.load %arg5[%c0_63, %c320] : memref<2x512xf32, #tpu.memory_space<vmem>>, vector<2x32xf32>
    tpu.vector_store %arg5[%c0_63, %c320], %382 {strides = array<i32>} : memref<2x512xf32, #tpu.memory_space<vmem>>, vector<2x32xf32>,
    %c0_64 = arith.constant 0 : index
    %c160 = arith.constant 160 : index
    %416 = vector.load %arg5[%c0_64, %c160] : memref<2x512xf32, #tpu.memory_space<vmem>>, vector<2x32xf32>
    tpu.vector_store %arg5[%c0_64, %c160], %413 {strides = array<i32>} : memref<2x512xf32, #tpu.memory_space<vmem>>, vector<2x32xf32>,
    %cst_65 = arith.constant dense<0.000000e+00> : vector<2x192xf32>
    %417 = tpu.matmul %414, %6, %cst_65 {dimension_numbers = #tpu.dot_dimension_numbers<[1], [0], [0], [1], [0, 0, 1, 1], [], []>} : vector<2x64xf32>, vector<64x192xf32>, vector<2x192xf32> -> vector<2x192xf32>
    %418 = vector.extract_strided_slice %5 {offsets = [12, 0], sizes = [2, 96], strides = [1, 1]} : vector<16x192xf32> to vector<2x96xf32>
    %419 = vector.extract_strided_slice %5 {offsets = [2, 96], sizes = [2, 96], strides = [1, 1]} : vector<16x192xf32> to vector<2x96xf32>
    %420 = vector.extract_strided_slice %417 {offsets = [0, 0], sizes = [2, 96], strides = [1, 1]} : vector<2x192xf32> to vector<2x96xf32>
    %421 = vector.extract_strided_slice %7 {offsets = [0, 0], sizes = [1, 32], strides = [1, 1]} : vector<1x64xf32> to vector<1x32xf32>
    %422 = vector.extract_strided_slice %414 {offsets = [0, 0], sizes = [2, 32], strides = [1, 1]} : vector<2x64xf32> to vector<2x32xf32>
    %423 = vector.extract_strided_slice %418 {offsets = [0, 0], sizes = [2, 32], strides = [1, 1]} : vector<2x96xf32> to vector<2x32xf32>
    %424 = vector.extract_strided_slice %420 {offsets = [0, 0], sizes = [2, 32], strides = [1, 1]} : vector<2x96xf32> to vector<2x32xf32>
    %425 = arith.addf %423, %424 : vector<2x32xf32>
    %426 = arith.negf %425 : vector<2x32xf32>
    %427 = math.exp %426 : vector<2x32xf32>
    %cst_66 = arith.constant 1.000000e+00 : f32
    %428 = vector.broadcast %cst_66 : f32 to vector<2x32xf32>
    %429 = arith.addf %428, %427 : vector<2x32xf32>
    %430 = arith.divf %428, %429 : vector<2x32xf32>
    %431 = vector.extract_strided_slice %418 {offsets = [0, 32], sizes = [2, 32], strides = [1, 1]} : vector<2x96xf32> to vector<2x32xf32>
    %432 = vector.extract_strided_slice %420 {offsets = [0, 32], sizes = [2, 32], strides = [1, 1]} : vector<2x96xf32> to vector<2x32xf32>
    %433 = arith.addf %431, %432 : vector<2x32xf32>
    %434 = arith.negf %433 : vector<2x32xf32>
    %435 = math.exp %434 : vector<2x32xf32>
    %cst_67 = arith.constant 1.000000e+00 : f32
    %436 = vector.broadcast %cst_67 : f32 to vector<2x32xf32>
    %437 = arith.addf %436, %435 : vector<2x32xf32>
    %438 = arith.divf %436, %437 : vector<2x32xf32>
    %439 = vector.extract_strided_slice %418 {offsets = [0, 64], sizes = [2, 32], strides = [1, 1]} : vector<2x96xf32> to vector<2x32xf32>
    %440 = vector.extract_strided_slice %420 {offsets = [0, 64], sizes = [2, 32], strides = [1, 1]} : vector<2x96xf32> to vector<2x32xf32>
    %441 = vector.broadcast %421 : vector<1x32xf32> to vector<2x32xf32>
    %442 = arith.addf %440, %441 : vector<2x32xf32>
    %443 = arith.mulf %430, %442 : vector<2x32xf32>
    %444 = arith.addf %439, %443 : vector<2x32xf32>
    %445 = math.tanh %444 : vector<2x32xf32>
    %cst_68 = arith.constant 1.000000e+00 : f32
    %446 = vector.broadcast %cst_68 : f32 to vector<2x32xf32>
    %447 = arith.subf %446, %438 : vector<2x32xf32>
    %448 = arith.mulf %447, %445 : vector<2x32xf32>
    %449 = arith.mulf %438, %422 : vector<2x32xf32>
    %450 = arith.addf %448, %449 : vector<2x32xf32>
    %451 = vector.extract_strided_slice %417 {offsets = [0, 96], sizes = [2, 96], strides = [1, 1]} : vector<2x192xf32> to vector<2x96xf32>
    %452 = vector.extract_strided_slice %7 {offsets = [0, 32], sizes = [1, 32], strides = [1, 1]} : vector<1x64xf32> to vector<1x32xf32>
    %453 = vector.extract_strided_slice %414 {offsets = [0, 32], sizes = [2, 32], strides = [1, 1]} : vector<2x64xf32> to vector<2x32xf32>
    %454 = vector.extract_strided_slice %419 {offsets = [0, 0], sizes = [2, 32], strides = [1, 1]} : vector<2x96xf32> to vector<2x32xf32>
    %455 = vector.extract_strided_slice %451 {offsets = [0, 0], sizes = [2, 32], strides = [1, 1]} : vector<2x96xf32> to vector<2x32xf32>
    %456 = arith.addf %454, %455 : vector<2x32xf32>
    %457 = arith.negf %456 : vector<2x32xf32>
    %458 = math.exp %457 : vector<2x32xf32>
    %cst_69 = arith.constant 1.000000e+00 : f32
    %459 = vector.broadcast %cst_69 : f32 to vector<2x32xf32>
    %460 = arith.addf %459, %458 : vector<2x32xf32>
    %461 = arith.divf %459, %460 : vector<2x32xf32>
    %462 = vector.extract_strided_slice %419 {offsets = [0, 32], sizes = [2, 32], strides = [1, 1]} : vector<2x96xf32> to vector<2x32xf32>
    %463 = vector.extract_strided_slice %451 {offsets = [0, 32], sizes = [2, 32], strides = [1, 1]} : vector<2x96xf32> to vector<2x32xf32>
    %464 = arith.addf %462, %463 : vector<2x32xf32>
    %465 = arith.negf %464 : vector<2x32xf32>
    %466 = math.exp %465 : vector<2x32xf32>
    %cst_70 = arith.constant 1.000000e+00 : f32
    %467 = vector.broadcast %cst_70 : f32 to vector<2x32xf32>
    %468 = arith.addf %467, %466 : vector<2x32xf32>
    %469 = arith.divf %467, %468 : vector<2x32xf32>
    %470 = vector.extract_strided_slice %419 {offsets = [0, 64], sizes = [2, 32], strides = [1, 1]} : vector<2x96xf32> to vector<2x32xf32>
    %471 = vector.extract_strided_slice %451 {offsets = [0, 64], sizes = [2, 32], strides = [1, 1]} : vector<2x96xf32> to vector<2x32xf32>
    %472 = vector.broadcast %452 : vector<1x32xf32> to vector<2x32xf32>
    %473 = arith.addf %471, %472 : vector<2x32xf32>
    %474 = arith.mulf %461, %473 : vector<2x32xf32>
    %475 = arith.addf %470, %474 : vector<2x32xf32>
    %476 = math.tanh %475 : vector<2x32xf32>
    %cst_71 = arith.constant 1.000000e+00 : f32
    %477 = vector.broadcast %cst_71 : f32 to vector<2x32xf32>
    %478 = arith.subf %477, %469 : vector<2x32xf32>
    %479 = arith.mulf %478, %476 : vector<2x32xf32>
    %480 = arith.mulf %469, %453 : vector<2x32xf32>
    %481 = arith.addf %479, %480 : vector<2x32xf32>
    %482 = tpu.concatenate %450, %481 in 1 : vector<2x32xf32>, vector<2x32xf32> -> vector<2x64xf32>
    %c0_72 = arith.constant 0 : index
    %c384 = arith.constant 384 : index
    %483 = vector.load %arg5[%c0_72, %c384] : memref<2x512xf32, #tpu.memory_space<vmem>>, vector<2x32xf32>
    tpu.vector_store %arg5[%c0_72, %c384], %450 {strides = array<i32>} : memref<2x512xf32, #tpu.memory_space<vmem>>, vector<2x32xf32>,
    %c0_73 = arith.constant 0 : index
    %c96 = arith.constant 96 : index
    %484 = vector.load %arg5[%c0_73, %c96] : memref<2x512xf32, #tpu.memory_space<vmem>>, vector<2x32xf32>
    tpu.vector_store %arg5[%c0_73, %c96], %481 {strides = array<i32>} : memref<2x512xf32, #tpu.memory_space<vmem>>, vector<2x32xf32>,
    %cst_74 = arith.constant dense<0.000000e+00> : vector<2x192xf32>
    %485 = tpu.matmul %482, %6, %cst_74 {dimension_numbers = #tpu.dot_dimension_numbers<[1], [0], [0], [1], [0, 0, 1, 1], [], []>} : vector<2x64xf32>, vector<64x192xf32>, vector<2x192xf32> -> vector<2x192xf32>
    %486 = vector.extract_strided_slice %5 {offsets = [14, 0], sizes = [2, 96], strides = [1, 1]} : vector<16x192xf32> to vector<2x96xf32>
    %487 = vector.extract_strided_slice %5 {offsets = [0, 96], sizes = [2, 96], strides = [1, 1]} : vector<16x192xf32> to vector<2x96xf32>
    %488 = vector.extract_strided_slice %485 {offsets = [0, 0], sizes = [2, 96], strides = [1, 1]} : vector<2x192xf32> to vector<2x96xf32>
    %489 = vector.extract_strided_slice %7 {offsets = [0, 0], sizes = [1, 32], strides = [1, 1]} : vector<1x64xf32> to vector<1x32xf32>
    %490 = vector.extract_strided_slice %482 {offsets = [0, 0], sizes = [2, 32], strides = [1, 1]} : vector<2x64xf32> to vector<2x32xf32>
    %491 = vector.extract_strided_slice %486 {offsets = [0, 0], sizes = [2, 32], strides = [1, 1]} : vector<2x96xf32> to vector<2x32xf32>
    %492 = vector.extract_strided_slice %488 {offsets = [0, 0], sizes = [2, 32], strides = [1, 1]} : vector<2x96xf32> to vector<2x32xf32>
    %493 = arith.addf %491, %492 : vector<2x32xf32>
    %494 = arith.negf %493 : vector<2x32xf32>
    %495 = math.exp %494 : vector<2x32xf32>
    %cst_75 = arith.constant 1.000000e+00 : f32
    %496 = vector.broadcast %cst_75 : f32 to vector<2x32xf32>
    %497 = arith.addf %496, %495 : vector<2x32xf32>
    %498 = arith.divf %496, %497 : vector<2x32xf32>
    %499 = vector.extract_strided_slice %486 {offsets = [0, 32], sizes = [2, 32], strides = [1, 1]} : vector<2x96xf32> to vector<2x32xf32>
    %500 = vector.extract_strided_slice %488 {offsets = [0, 32], sizes = [2, 32], strides = [1, 1]} : vector<2x96xf32> to vector<2x32xf32>
    %501 = arith.addf %499, %500 : vector<2x32xf32>
    %502 = arith.negf %501 : vector<2x32xf32>
    %503 = math.exp %502 : vector<2x32xf32>
    %cst_76 = arith.constant 1.000000e+00 : f32
    %504 = vector.broadcast %cst_76 : f32 to vector<2x32xf32>
    %505 = arith.addf %504, %503 : vector<2x32xf32>
    %506 = arith.divf %504, %505 : vector<2x32xf32>
    %507 = vector.extract_strided_slice %486 {offsets = [0, 64], sizes = [2, 32], strides = [1, 1]} : vector<2x96xf32> to vector<2x32xf32>
    %508 = vector.extract_strided_slice %488 {offsets = [0, 64], sizes = [2, 32], strides = [1, 1]} : vector<2x96xf32> to vector<2x32xf32>
    %509 = vector.broadcast %489 : vector<1x32xf32> to vector<2x32xf32>
    %510 = arith.addf %508, %509 : vector<2x32xf32>
    %511 = arith.mulf %498, %510 : vector<2x32xf32>
    %512 = arith.addf %507, %511 : vector<2x32xf32>
    %513 = math.tanh %512 : vector<2x32xf32>
    %cst_77 = arith.constant 1.000000e+00 : f32
    %514 = vector.broadcast %cst_77 : f32 to vector<2x32xf32>
    %515 = arith.subf %514, %506 : vector<2x32xf32>
    %516 = arith.mulf %515, %513 : vector<2x32xf32>
    %517 = arith.mulf %506, %490 : vector<2x32xf32>
    %518 = arith.addf %516, %517 : vector<2x32xf32>
    %519 = vector.extract_strided_slice %485 {offsets = [0, 96], sizes = [2, 96], strides = [1, 1]} : vector<2x192xf32> to vector<2x96xf32>
    %520 = vector.extract_strided_slice %7 {offsets = [0, 32], sizes = [1, 32], strides = [1, 1]} : vector<1x64xf32> to vector<1x32xf32>
    %521 = vector.extract_strided_slice %482 {offsets = [0, 32], sizes = [2, 32], strides = [1, 1]} : vector<2x64xf32> to vector<2x32xf32>
    %522 = vector.extract_strided_slice %487 {offsets = [0, 0], sizes = [2, 32], strides = [1, 1]} : vector<2x96xf32> to vector<2x32xf32>
    %523 = vector.extract_strided_slice %519 {offsets = [0, 0], sizes = [2, 32], strides = [1, 1]} : vector<2x96xf32> to vector<2x32xf32>
    %524 = arith.addf %522, %523 : vector<2x32xf32>
    %525 = arith.negf %524 : vector<2x32xf32>
    %526 = math.exp %525 : vector<2x32xf32>
    %cst_78 = arith.constant 1.000000e+00 : f32
    %527 = vector.broadcast %cst_78 : f32 to vector<2x32xf32>
    %528 = arith.addf %527, %526 : vector<2x32xf32>
    %529 = arith.divf %527, %528 : vector<2x32xf32>
    %530 = vector.extract_strided_slice %487 {offsets = [0, 32], sizes = [2, 32], strides = [1, 1]} : vector<2x96xf32> to vector<2x32xf32>
    %531 = vector.extract_strided_slice %519 {offsets = [0, 32], sizes = [2, 32], strides = [1, 1]} : vector<2x96xf32> to vector<2x32xf32>
    %532 = arith.addf %530, %531 : vector<2x32xf32>
    %533 = arith.negf %532 : vector<2x32xf32>
    %534 = math.exp %533 : vector<2x32xf32>
    %cst_79 = arith.constant 1.000000e+00 : f32
    %535 = vector.broadcast %cst_79 : f32 to vector<2x32xf32>
    %536 = arith.addf %535, %534 : vector<2x32xf32>
    %537 = arith.divf %535, %536 : vector<2x32xf32>
    %538 = vector.extract_strided_slice %487 {offsets = [0, 64], sizes = [2, 32], strides = [1, 1]} : vector<2x96xf32> to vector<2x32xf32>
    %539 = vector.extract_strided_slice %519 {offsets = [0, 64], sizes = [2, 32], strides = [1, 1]} : vector<2x96xf32> to vector<2x32xf32>
    %540 = vector.broadcast %520 : vector<1x32xf32> to vector<2x32xf32>
    %541 = arith.addf %539, %540 : vector<2x32xf32>
    %542 = arith.mulf %529, %541 : vector<2x32xf32>
    %543 = arith.addf %538, %542 : vector<2x32xf32>
    %544 = math.tanh %543 : vector<2x32xf32>
    %cst_80 = arith.constant 1.000000e+00 : f32
    %545 = vector.broadcast %cst_80 : f32 to vector<2x32xf32>
    %546 = arith.subf %545, %537 : vector<2x32xf32>
    %547 = arith.mulf %546, %544 : vector<2x32xf32>
    %548 = arith.mulf %537, %521 : vector<2x32xf32>
    %549 = arith.addf %547, %548 : vector<2x32xf32>
    %c0_81 = arith.constant 0 : index
    %c448 = arith.constant 448 : index
    %550 = vector.load %arg5[%c0_81, %c448] : memref<2x512xf32, #tpu.memory_space<vmem>>, vector<2x32xf32>
    tpu.vector_store %arg5[%c0_81, %c448], %518 {strides = array<i32>} : memref<2x512xf32, #tpu.memory_space<vmem>>, vector<2x32xf32>,
    %c0_82 = arith.constant 0 : index
    %c32 = arith.constant 32 : index
    %551 = vector.load %arg5[%c0_82, %c32] : memref<2x512xf32, #tpu.memory_space<vmem>>, vector<2x32xf32>
    tpu.vector_store %arg5[%c0_82, %c32], %549 {strides = array<i32>} : memref<2x512xf32, #tpu.memory_space<vmem>>, vector<2x32xf32>,
    return
  }
}

</mosaic_0001>

<llo_original>
// kernel: copynet_forward.1
$region0: #{copynet_forward.1}
  #allocation0 [shape = 'u32[]', space=smem, size = 0x4, offset = 0x4, fixed_abs, tag = 'smem constant byte address 0x4 - core index']
  #allocation1 [shape = 'u32[144,128]{1,0:T(1,128)}', space=vmem, size = 0x12000, scoped, tag = 'internal scratch']
  %s0 = inlined_call_operand.vmem [shape: f32[16,32], index: 0, kind: input, shape index: {}]
  %s1 = inlined_call_operand.vmem [shape: f32[32,192], index: 1, kind: input, shape index: {}]
  %s2 = inlined_call_operand.vmem [shape: f32[64,192], index: 2, kind: input, shape index: {}]
  %s3 = inlined_call_operand.vmem [shape: f32[1,192], index: 3, kind: input, shape index: {}]
  %s4 = inlined_call_operand.vmem [shape: f32[1,64], index: 4, kind: input, shape index: {}]
  %s5 = inlined_call_operand.vmem [shape: f32[2,512], index: 5, kind: output, shape index: {}]
  %s6 = sld [smem:[#allocation0]]
  $region30: #{copynet_forward.1} parent=0
    _
  %s8 = ssub.s32 1, %s6
  %s9 = scalar_select 0, %s8, %s6
  // Predicated region
  $region2: #{copynet_forward.1} parent=0 // pred_check
    _
  $region3: #{copynet_forward.1} parent=0 // pred_check_branch
    %11 = sbr.rel (0) target = $region5
  $region4: #{copynet_forward.1} parent=0 // pred_region
    _
  $region5: #{copynet_forward.1} parent=0 // pred_fallthru
    _
  // Predicated region
  $region6: #{copynet_forward.1} parent=0 // pred_check
    _
  $region7: #{copynet_forward.1} parent=0 // pred_check_branch
    %13 = sbr.rel (0) target = $region9
  $region8: #{copynet_forward.1} parent=0 // pred_region
    _
  $region9: #{copynet_forward.1} parent=0 // pred_fallthru
    _
  // Predicated region
  $region10: #{copynet_forward.1} parent=0 // pred_check
    _
  $region11: #{copynet_forward.1} parent=0 // pred_check_branch
    %15 = sbr.rel (0) target = $region13
  $region12: #{copynet_forward.1} parent=0 // pred_region
    _
  $region13: #{copynet_forward.1} parent=0 // pred_fallthru
    _
  // Predicated region
  $region14: #{copynet_forward.1} parent=0 // pred_check
    _
  $region15: #{copynet_forward.1} parent=0 // pred_check_branch
    %17 = sbr.rel (0) target = $region17
  $region16: #{copynet_forward.1} parent=0 // pred_region
    _
  $region17: #{copynet_forward.1} parent=0 // pred_fallthru
    _
  // Predicated region
  $region18: #{copynet_forward.1} parent=0 // pred_check
    _
  $region19: #{copynet_forward.1} parent=0 // pred_check_branch
    %19 = sbr.rel (0) target = $region21
  $region20: #{copynet_forward.1} parent=0 // pred_region
    _
  $region21: #{copynet_forward.1} parent=0 // pred_fallthru
    _
  %v20 = vld [vmem:[%s0] sm:$0xff]
  %v21 = vld [vmem:[%s0 + $0x8] sm:$0xff]
  %v22 = vld [vmem:[%s1] sm:$0xff]
  %v23 = vld [vmem:[%s1 + $0x8] sm:$0xff]
  %v24 = vld [vmem:[%s1 + $0x10] sm:$0xff]
  %v25 = vld [vmem:[%s1 + $0x18] sm:$0xff]
  %v26 = vld [vmem:[%s1 + $0x20] sm:$0xff]
  %v27 = vld [vmem:[%s1 + $0x28] sm:$0xff]
  %v28 = vld [vmem:[%s1 + $0x30] sm:$0xff]
  %v29 = vld [vmem:[%s1 + $0x38] sm:$0xff]
  %v30 = vld [vmem:[%s3] sm:$0x3]
  %v32 = vlaneseq
  %v33 = vshrl.u32 %v32, 7
  %v34 = vsub.s32 0, %v33
  %v35 = vrot.slane %v30, %v34
  %v36 = vlaneseq
  %v37 = vshrl.u32 %v36, 7
  %v38 = vsub.s32 1, %v37
  %v39 = vrot.slane %v30, %v38
  %vm42 = vcmask 261120
  %v44 = vsel %vm42, %v20, 0
  %v47 = vsel %vm42, %v21, 0
  %49 = vmatprep.subr.mxu0 %v23
  %50 = vmatpush1.msra.mxu0 %v22
  %51 = vmatprep.subr.mxu0 %v25
  %52 = vmatpush1.msra.mxu0 %v24
  %53 = vmatprep.subr.mxu0 %v27
  %54 = vmatpush1.msra.mxu0 %v26
  %55 = vmatprep.subr.mxu0 %v29
  %56 = vmatpush1.msra.mxu0 %v28
  %57 = vmatprep.subr.mxu0 0.0
  %58 = vmatpush1.msra.mxu0 0.0
  %59 = vmatprep.subr.mxu0 0.0
  %60 = vmatpush1.msra.mxu0 0.0
  %61 = vmatprep.subr.mxu0 0.0
  %62 = vmatpush1.msra.mxu0 0.0
  %63 = vmatprep.subr.mxu0 0.0
  %64 = vmatpush1.msra.mxu0 0.0
  %65 = vmatprep.subr.mxu0 0.0
  %66 = vmatpush1.msra.mxu0 0.0
  %67 = vmatprep.subr.mxu0 0.0
  %68 = vmatpush1.msra.mxu0 0.0
  %69 = vmatprep.subr.mxu0 0.0
  %70 = vmatpush1.msra.mxu0 0.0
  %71 = vmatprep.subr.mxu0 0.0
  %72 = vmatpush1.msra.mxu0 0.0
  %73 = vmatprep.subr.mxu0 0.0
  %74 = vmatpush1.msra.mxu0 0.0
  %75 = vmatprep.subr.mxu0 0.0
  %76 = vmatpush1.msra.mxu0 0.0
  %77 = vmatprep.subr.mxu0 0.0
  %78 = vmatpush1.msra.mxu0 0.0
  %79 = vmatprep.subr.mxu0 0.0
  %80 = vmatpush1.msra.mxu0 0.0
  %81 = vmatprep.subr.mxu0 0.0
  %82 = vmatpush1.msra.mxu0 0.0
  %83 = vmatprep.subr.mxu0 0.0
  %84 = vmatpush1.msra.mxu0 0.0
  %85 = vmatprep.subr.mxu0 0.0
  %86 = vmatpush1.msra.mxu0 0.0
  %87 = vmatprep.subr.mxu0 0.0
  %88 = vmatpush1.msra.mxu0 0.0
  %89 = vmatprep.subr.mxu0 0.0
  %90 = vmatpush1.msra.mxu0 0.0
  %91 = vmatprep.subr.mxu0 0.0
  %92 = vmatpush1.msra.mxu0 0.0
  %93 = vmatprep.subr.mxu0 0.0
  %94 = vmatpush1.msra.mxu0 0.0
  %95 = vmatprep.subr.mxu0 0.0
  %96 = vmatpush1.msra.mxu0 0.0
  %97 = vmatprep.subr.mxu0 0.0
  %98 = vmatpush1.msra.mxu0 0.0
  %99 = vmatprep.subr.mxu0 0.0
  %100 = vmatpush1.msra.mxu0 0.0
  %101 = vmatprep.subr.mxu0 0.0
  %102 = vmatpush1.msra.mxu0 0.0
  %103 = vmatprep.subr.mxu0 0.0
  %104 = vmatpush1.msra.mxu0 0.0
  %105 = vmatprep.subr.mxu0 0.0
  %106 = vmatpush1.msra.mxu0 0.0
  %107 = vmatprep.subr.mxu0 0.0
  %108 = vmatpush1.msra.mxu0 0.0
  %109 = vmatprep.subr.mxu0 0.0
  %110 = vmatpush1.msra.mxu0 0.0
  %111 = vmatprep.subr.mxu0 0.0
  %112 = vmatpush1.msra.mxu0 0.0
  %113 = vmatprep.mubr.f32.mxu0 0.0
  %114 = vmatmul.mubr.f32.gmra.mrb[0].mxu0 %v44
  %v115 = vpop.f32.mrb[0].mxu0
  %v116 = vadd.f32 %v35, %v115
  %v117 = vpop.f32.mrb[0].mxu0
  %v118 = vadd.f32 %v39, %v117
  %119 = vmatprep.mubr.f32.mxu0 0.0
  %120 = vmatmul.mubr.f32.gmra.mrb[0].mxu0 %v47
  %v121 = vpop.f32.mrb[0].mxu0
  %v122 = vadd.f32 %v35, %v121
  %v123 = vpop.f32.mrb[0].mxu0
  %v124 = vadd.f32 %v39, %v123
  %125 = vdwg.mxu0
  %v126 = vld [vmem:[%s2] sm:$0xff]
  %v127 = vld [vmem:[%s2 + $0x8] sm:$0xff]
  %v128 = vld [vmem:[%s2 + $0x10] sm:$0xff]
  %v129 = vld [vmem:[%s2 + $0x18] sm:$0xff]
  %v130 = vld [vmem:[%s2 + $0x20] sm:$0xff]
  %v131 = vld [vmem:[%s2 + $0x28] sm:$0xff]
  %v132 = vld [vmem:[%s2 + $0x30] sm:$0xff]
  %v133 = vld [vmem:[%s2 + $0x38] sm:$0xff]
  %v134 = vld [vmem:[%s2 + $0x40] sm:$0xff]
  %v135 = vld [vmem:[%s2 + $0x48] sm:$0xff]
  %v136 = vld [vmem:[%s2 + $0x50] sm:$0xff]
  %v137 = vld [vmem:[%s2 + $0x58] sm:$0xff]
  %v138 = vld [vmem:[%s2 + $0x60] sm:$0xff]
  %v139 = vld [vmem:[%s2 + $0x68] sm:$0xff]
  %v140 = vld [vmem:[%s2 + $0x70] sm:$0xff]
  %v141 = vld [vmem:[%s2 + $0x78] sm:$0xff]
  %v142 = vld [vmem:[%s4] sm:$0x1]
  %vm143 = vcmask 523264
  %v145 = vsel %vm143, 0.0, 0
  %147 = vmatprep.subr.mxu0 %v127
  %148 = vmatpush1.msra.mxu0 %v126
  %149 = vmatprep.subr.mxu0 %v129
  %150 = vmatpush1.msra.mxu0 %v128
  %151 = vmatprep.subr.mxu0 %v131
  %152 = vmatpush1.msra.mxu0 %v130
  %153 = vmatprep.subr.mxu0 %v133
  %154 = vmatpush1.msra.mxu0 %v132
  %155 = vmatprep.subr.mxu0 %v135
  %156 = vmatpush1.msra.mxu0 %v134
  %157 = vmatprep.subr.mxu0 %v137
  %158 = vmatpush1.msra.mxu0 %v136
  %159 = vmatprep.subr.mxu0 %v139
  %160 = vmatpush1.msra.mxu0 %v138
  %161 = vmatprep.subr.mxu0 %v141
  %162 = vmatpush1.msra.mxu0 %v140
  %163 = vmatprep.subr.mxu0 0.0
  %164 = vmatpush1.msra.mxu0 0.0
  %165 = vmatprep.subr.mxu0 0.0
  %166 = vmatpush1.msra.mxu0 0.0
  %167 = vmatprep.subr.mxu0 0.0
  %168 = vmatpush1.msra.mxu0 0.0
  %169 = vmatprep.subr.mxu0 0.0
  %170 = vmatpush1.msra.mxu0 0.0
  %171 = vmatprep.subr.mxu0 0.0
  %172 = vmatpush1.msra.mxu0 0.0
  %173 = vmatprep.subr.mxu0 0.0
  %174 = vmatpush1.msra.mxu0 0.0
  %175 = vmatprep.subr.mxu0 0.0
  %176 = vmatpush1.msra.mxu0 0.0
  %177 = vmatprep.subr.mxu0 0.0
  %178 = vmatpush1.msra.mxu0 0.0
  %179 = vmatprep.subr.mxu0 0.0
  %180 = vmatpush1.msra.mxu0 0.0
  %181 = vmatprep.subr.mxu0 0.0
  %182 = vmatpush1.msra.mxu0 0.0
  %183 = vmatprep.subr.mxu0 0.0
  %184 = vmatpush1.msra.mxu0 0.0
  %185 = vmatprep.subr.mxu0 0.0
  %186 = vmatpush1.msra.mxu0 0.0
  %187 = vmatprep.subr.mxu0 0.0
  %188 = vmatpush1.msra.mxu0 0.0
  %189 = vmatprep.subr.mxu0 0.0
  %190 = vmatpush1.msra.mxu0 0.0
  %191 = vmatprep.subr.mxu0 0.0
  %192 = vmatpush1.msra.mxu0 0.0
  %193 = vmatprep.subr.mxu0 0.0
  %194 = vmatpush1.msra.mxu0 0.0
  %195 = vmatprep.subr.mxu0 0.0
  %196 = vmatpush1.msra.mxu0 0.0
  %197 = vmatprep.subr.mxu0 0.0
  %198 = vmatpush1.msra.mxu0 0.0
  %199 = vmatprep.subr.mxu0 0.0
  %200 = vmatpush1.msra.mxu0 0.0
  %201 = vmatprep.subr.mxu0 0.0
  %202 = vmatpush1.msra.mxu0 0.0
  %203 = vmatprep.subr.mxu0 0.0
  %204 = vmatpush1.msra.mxu0 0.0
  %205 = vmatprep.subr.mxu0 0.0
  %206 = vmatpush1.msra.mxu0 0.0
  %207 = vmatprep.subr.mxu0 0.0
  %208 = vmatpush1.msra.mxu0 0.0
  %209 = vmatprep.subr.mxu0 0.0
  %210 = vmatpush1.msra.mxu0 0.0
  %211 = vmatprep.mubr.f32.mxu0 0.0
  %212 = vmatmul.mubr.f32.gmra.mrb[0].mxu0 %v145
  %v213 = vpop.f32.mrb[0].mxu0
  %v214 = vadd.f32 0.0, %v213
  %v215 = vpop.f32.mrb[0].mxu0
  %v216 = vadd.f32 0.0, %v215
  %217 = vdwg.mxu0
  %v218 = vadd.f32 %v116, %v214
  %v219 = vxor.u32 %v218, 2147483648
  %v220 = vmul.f32 %v219, 1.442695
  %v221 = vpow.pop %v220
  %v222 = vadd.f32 %v221, 1.0
  %v223 = vrcp.pop %v222
  %v224 = vmul.f32 1.0, %v223
  %v226 = vlaneseq
  %v227 = vshrl.u32 %v226, 7
  %v228 = vsub.s32 0, %v227
  %v229 = vrot.slane %v142, %v228
  %230 = vrot.lane.b32.xlu0 %v229, 64
  %v231 = vpop.permute.xlu0 %230
  %v233 = vadd.f32 %v214, %v231
  %235 = vrot.lane.b32.xlu0 %v233, 64
  %v236 = vpop.permute.xlu0 %235
  %v238 = vmul.f32 %v224, %v236
  %240 = vrot.lane.b32.xlu0 %v238, 64
  %v241 = vpop.permute.xlu0 %240
  %v243 = vadd.f32 %v116, %v241
  %v244 = vtanh.pop %v243
  %v245 = vsub.f32 1.0, %v224
  %247 = vrot.lane.b32.xlu0 %v244, 96
  %v248 = vpop.permute.xlu0 %247
  %v250 = vmul.f32 %v245, %v248
  %v251 = vmul.f32 %v224, 0.0
  %v252 = vadd.f32 %v250, %v251
  %v254 = vrot.slane %v214, 2
  %v256 = vadd.f32 %v122, %v254
  %v257 = vxor.u32 %v256, 2147483648
  %v258 = vmul.f32 %v257, 1.442695
  %v259 = vpow.pop %v258
  %v260 = vadd.f32 %v259, 1.0
  %v261 = vrcp.pop %v260
  %v262 = vmul.f32 1.0, %v261
  %v264 = vrot.slane %v216, 2
  %v266 = vadd.f32 %v124, %v264
  %v267 = vxor.u32 %v266, 2147483648
  %v268 = vmul.f32 %v267, 1.442695
  %v269 = vpow.pop %v268
  %v270 = vadd.f32 %v269, 1.0
  %v271 = vrcp.pop %v270
  %v272 = vmul.f32 1.0, %v271
  %v274 = vadd.f32 %v216, %v229
  %v276 = vrot.slane %v274, 2
  %277 = vrot.lane.b32.xlu0 %v276, 64
  %v278 = vpop.permute.xlu0 %277
  %v280 = vmul.f32 %v262, %v278
  %282 = vrot.lane.b32.xlu0 %v280, 64
  %v283 = vpop.permute.xlu0 %282
  %v285 = vadd.f32 %v124, %v283
  %v286 = vtanh.pop %v285
  %v287 = vsub.f32 1.0, %v272
  %289 = vrot.lane.b32.xlu0 %v286, 96
  %v290 = vpop.permute.xlu0 %289
  %v292 = vmul.f32 %v287, %v290
  %v293 = vmul.f32 %v272, 0.0
  %v294 = vadd.f32 %v292, %v293
  %296 = vrot.lane.b32.xlu0 %v252, 96
  %v297 = vpop.permute.xlu0 %296
  %v300 = vrot.slane %v294, 6
  %301 = vrot.lane.b32.xlu0 %v300, 32
  %v302 = vpop.permute.xlu0 %301
  %v304 = vsel %vm42, %v297, %v302
  %v306 = vunpack.c.l.s4 1983009808
  %v307 = vunpack.c.0.s8 %v306
  %v308 = vlaneseq
  %v309 = vshrl.u32 %v308, 7
  %v310 = vsub.s32 %v307, %v309
  %v311 = vrot.slane %v252, %v310
  %312 = vrot.lane.b32.xlu0 %v311, 96
  %v313 = vpop.permute.xlu0 %312
  %vm315 = vcmask 254976
  %316 = vst.msk [vmem:[%s5] sm:$0x3] %vm315, %v313
  %v317 = vcombine.high %v294, %v294
  %v319 = vunpack.c.l.s4 1983009808
  %v320 = vunpack.c.0.s8 %v319
  %v321 = vlaneseq
  %v322 = vshrl.u32 %v321, 7
  %v323 = vsub.s32 %v320, %v322
  %v324 = vrot.slane %v317, %v323
  %v325 = vcombine.high %v324, %v324
  %326 = vrot.lane.b32.xlu0 %v325, 96
  %v327 = vpop.permute.xlu0 %326
  %vm329 = vcmask 1042176
  %330 = vst.msk [vmem:[%s5 + $0x6] sm:$0x3] %vm329, %v327
  %v332 = vsel %vm143, %v304, 0
  %334 = vmatprep.subr.mxu0 %v127
  %335 = vmatpush1.msra.mxu0 %v126
  %336 = vmatprep.subr.mxu0 %v129
  %337 = vmatpush1.msra.mxu0 %v128
  %338 = vmatprep.subr.mxu0 %v131
  %339 = vmatpush1.msra.mxu0 %v130
  %340 = vmatprep.subr.mxu0 %v133
  %341 = vmatpush1.msra.mxu0 %v132
  %342 = vmatprep.subr.mxu0 %v135
  %343 = vmatpush1.msra.mxu0 %v134
  %344 = vmatprep.subr.mxu0 %v137
  %345 = vmatpush1.msra.mxu0 %v136
  %346 = vmatprep.subr.mxu0 %v139
  %347 = vmatpush1.msra.mxu0 %v138
  %348 = vmatprep.subr.mxu0 %v141
  %349 = vmatpush1.msra.mxu0 %v140
  %350 = vmatprep.subr.mxu0 0.0
  %351 = vmatpush1.msra.mxu0 0.0
  %352 = vmatprep.subr.mxu0 0.0
  %353 = vmatpush1.msra.mxu0 0.0
  %354 = vmatprep.subr.mxu0 0.0
  %355 = vmatpush1.msra.mxu0 0.0
  %356 = vmatprep.subr.mxu0 0.0
  %357 = vmatpush1.msra.mxu0 0.0
  %358 = vmatprep.subr.mxu0 0.0
  %359 = vmatpush1.msra.mxu0 0.0
  %360 = vmatprep.subr.mxu0 0.0
  %361 = vmatpush1.msra.mxu0 0.0
  %362 = vmatprep.subr.mxu0 0.0
  %363 = vmatpush1.msra.mxu0 0.0
  %364 = vmatprep.subr.mxu0 0.0
  %365 = vmatpush1.msra.mxu0 0.0
  %366 = vmatprep.subr.mxu0 0.0
  %367 = vmatpush1.msra.mxu0 0.0
  %368 = vmatprep.subr.mxu0 0.0
  %369 = vmatpush1.msra.mxu0 0.0
  %370 = vmatprep.subr.mxu0 0.0
  %371 = vmatpush1.msra.mxu0 0.0
  %372 = vmatprep.subr.mxu0 0.0
  %373 = vmatpush1.msra.mxu0 0.0
  %374 = vmatprep.subr.mxu0 0.0
  %375 = vmatpush1.msra.mxu0 0.0
  %376 = vmatprep.subr.mxu0 0.0
  %377 = vmatpush1.msra.mxu0 0.0
  %378 = vmatprep.subr.mxu0 0.0
  %379 = vmatpush1.msra.mxu0 0.0
  %380 = vmatprep.subr.mxu0 0.0
  %381 = vmatpush1.msra.mxu0 0.0
  %382 = vmatprep.subr.mxu0 0.0
  %383 = vmatpush1.msra.mxu0 0.0
  %384 = vmatprep.subr.mxu0 0.0
  %385 = vmatpush1.msra.mxu0 0.0
  %386 = vmatprep.subr.mxu0 0.0
  %387 = vmatpush1.msra.mxu0 0.0
  %388 = vmatprep.subr.mxu0 0.0
  %389 = vmatpush1.msra.mxu0 0.0
  %390 = vmatprep.subr.mxu0 0.0
  %391 = vmatpush1.msra.mxu0 0.0
  %392 = vmatprep.subr.mxu0 0.0
  %393 = vmatpush1.msra.mxu0 0.0
  %394 = vmatprep.subr.mxu0 0.0
  %395 = vmatpush1.msra.mxu0 0.0
  %396 = vmatprep.subr.mxu0 0.0
  %397 = vmatpush1.msra.mxu0 0.0
  %398 = vmatprep.mubr.f32.mxu0 0.0
  %399 = vmatmul.mubr.f32.gmra.mrb[0].mxu0 %v332
  %v400 = vpop.f32.mrb[0].mxu0
  %v401 = vadd.f32 0.0, %v400
  %v402 = vpop.f32.mrb[0].mxu0
  %v403 = vadd.f32 0.0, %v402
  %404 = vdwg.mxu0
  %v406 = vrot.slane %v401, 6
  %v408 = vadd.f32 %v116, %v406
  %v409 = vxor.u32 %v408, 2147483648
  %v410 = vmul.f32 %v409, 1.442695
  %v411 = vpow.pop %v410
  %v412 = vadd.f32 %v411, 1.0
  %v413 = vrcp.pop %v412
  %v414 = vmul.f32 1.0, %v413
  %v415 = vadd.f32 %v401, %v231
  %v417 = vrot.slane %v415, 6
  %418 = vrot.lane.b32.xlu0 %v417, 64
  %v419 = vpop.permute.xlu0 %418
  %v421 = vmul.f32 %v414, %v419
  %423 = vrot.lane.b32.xlu0 %v421, 64
  %v424 = vpop.permute.xlu0 %423
  %v426 = vadd.f32 %v116, %v424
  %v427 = vtanh.pop %v426
  %v428 = vsub.f32 1.0, %v414
  %430 = vrot.lane.b32.xlu0 %v427, 96
  %v431 = vpop.permute.xlu0 %430
  %v433 = vmul.f32 %v428, %v431
  %v434 = vrot.slane %v304, 6
  %435 = vrot.lane.b32.xlu0 %v434, 32
  %v436 = vpop.permute.xlu0 %435
  %v438 = vmul.f32 %v414, %v436
  %v439 = vadd.f32 %v433, %v438
  %v440 = vrot.slane %v401, 4
  %v442 = vadd.f32 %v122, %v440
  %v443 = vxor.u32 %v442, 2147483648
  %v444 = vmul.f32 %v443, 1.442695
  %v445 = vpow.pop %v444
  %v446 = vadd.f32 %v445, 1.0
  %v447 = vrcp.pop %v446
  %v448 = vmul.f32 1.0, %v447
  %v450 = vrot.slane %v403, 4
  %v452 = vadd.f32 %v124, %v450
  %v453 = vxor.u32 %v452, 2147483648
  %v454 = vmul.f32 %v453, 1.442695
  %v455 = vpow.pop %v454
  %v456 = vadd.f32 %v455, 1.0
  %v457 = vrcp.pop %v456
  %v458 = vmul.f32 1.0, %v457
  %v459 = vadd.f32 %v403, %v229
  %v461 = vrot.slane %v459, 4
  %462 = vrot.lane.b32.xlu0 %v461, 64
  %v463 = vpop.permute.xlu0 %462
  %v465 = vmul.f32 %v448, %v463
  %467 = vrot.lane.b32.xlu0 %v465, 64
  %v468 = vpop.permute.xlu0 %467
  %v470 = vadd.f32 %v124, %v468
  %v471 = vtanh.pop %v470
  %v472 = vsub.f32 1.0, %v458
  %474 = vrot.lane.b32.xlu0 %v471, 96
  %v475 = vpop.permute.xlu0 %474
  %v477 = vmul.f32 %v472, %v475
  %v478 = vrot.slane %v304, 4
  %479 = vrot.lane.b32.xlu0 %v478, 96
  %v480 = vpop.permute.xlu0 %479
  %v482 = vmul.f32 %v458, %v480
  %v483 = vadd.f32 %v477, %v482
  %485 = vrot.lane.b32.xlu0 %v439, 96
  %v486 = vpop.permute.xlu0 %485
  %v489 = vrot.slane %v483, 2
  %490 = vrot.lane.b32.xlu0 %v489, 32
  %v491 = vpop.permute.xlu0 %490
  %v493 = vsel %vm42, %v486, %v491
  %v495 = vunpack.c.l.s4 1983009808
  %v496 = vunpack.c.0.s8 %v495
  %v497 = vlaneseq
  %v498 = vshrl.u32 %v497, 7
  %v499 = vsub.s32 %v496, %v498
  %v500 = vrot.slane %v439, %v499
  %v501 = vcombine.high %v500, %v500
  %502 = vrot.lane.b32.xlu0 %v501, 32
  %v503 = vpop.permute.xlu0 %502
  %vm505 = vcmask 779776
  %506 = vst.msk [vmem:[%s5] sm:$0x3] %vm505, %v503
  %v507 = vcombine.high %v483, %v483
  %v509 = vunpack.c.l.s4 1983009808
  %v510 = vunpack.c.0.s8 %v509
  %v511 = vlaneseq
  %v512 = vshrl.u32 %v511, 7
  %v513 = vsub.s32 %v510, %v512
  %v514 = vrot.slane %v507, %v513
  %515 = vrot.lane.b32.xlu0 %v514, 32
  %v516 = vpop.permute.xlu0 %515
  %vm518 = vcmask 517376
  %519 = vst.msk [vmem:[%s5 + $0x6] sm:$0x3] %vm518, %v516
  %v521 = vrot.slane %v493, 2
  %v522 = vsel %vm143, %v521, 0
  %524 = vmatprep.subr.mxu0 %v127
  %525 = vmatpush1.msra.mxu0 %v126
  %526 = vmatprep.subr.mxu0 %v129
  %527 = vmatpush1.msra.mxu0 %v128
  %528 = vmatprep.subr.mxu0 %v131
  %529 = vmatpush1.msra.mxu0 %v130
  %530 = vmatprep.subr.mxu0 %v133
  %531 = vmatpush1.msra.mxu0 %v132
  %532 = vmatprep.subr.mxu0 %v135
  %533 = vmatpush1.msra.mxu0 %v134
  %534 = vmatprep.subr.mxu0 %v137
  %535 = vmatpush1.msra.mxu0 %v136
  %536 = vmatprep.subr.mxu0 %v139
  %537 = vmatpush1.msra.mxu0 %v138
  %538 = vmatprep.subr.mxu0 %v141
  %539 = vmatpush1.msra.mxu0 %v140
  %540 = vmatprep.subr.mxu0 0.0
  %541 = vmatpush1.msra.mxu0 0.0
  %542 = vmatprep.subr.mxu0 0.0
  %543 = vmatpush1.msra.mxu0 0.0
  %544 = vmatprep.subr.mxu0 0.0
  %545 = vmatpush1.msra.mxu0 0.0
  %546 = vmatprep.subr.mxu0 0.0
  %547 = vmatpush1.msra.mxu0 0.0
  %548 = vmatprep.subr.mxu0 0.0
  %549 = vmatpush1.msra.mxu0 0.0
  %550 = vmatprep.subr.mxu0 0.0
  %551 = vmatpush1.msra.mxu0 0.0
  %552 = vmatprep.subr.mxu0 0.0
  %553 = vmatpush1.msra.mxu0 0.0
  %554 = vmatprep.subr.mxu0 0.0
  %555 = vmatpush1.msra.mxu0 0.0
  %556 = vmatprep.subr.mxu0 0.0
  %557 = vmatpush1.msra.mxu0 0.0
  %558 = vmatprep.subr.mxu0 0.0
  %559 = vmatpush1.msra.mxu0 0.0
  %560 = vmatprep.subr.mxu0 0.0
  %561 = vmatpush1.msra.mxu0 0.0
  %562 = vmatprep.subr.mxu0 0.0
  %563 = vmatpush1.msra.mxu0 0.0
  %564 = vmatprep.subr.mxu0 0.0
  %565 = vmatpush1.msra.mxu0 0.0
  %566 = vmatprep.subr.mxu0 0.0
  %567 = vmatpush1.msra.mxu0 0.0
  %568 = vmatprep.subr.mxu0 0.0
  %569 = vmatpush1.msra.mxu0 0.0
  %570 = vmatprep.subr.mxu0 0.0
  %571 = vmatpush1.msra.mxu0 0.0
  %572 = vmatprep.subr.mxu0 0.0
  %573 = vmatpush1.msra.mxu0 0.0
  %574 = vmatprep.subr.mxu0 0.0
  %575 = vmatpush1.msra.mxu0 0.0
  %576 = vmatprep.subr.mxu0 0.0
  %577 = vmatpush1.msra.mxu0 0.0
  %578 = vmatprep.subr.mxu0 0.0
  %579 = vmatpush1.msra.mxu0 0.0
  %580 = vmatprep.subr.mxu0 0.0
  %581 = vmatpush1.msra.mxu0 0.0
  %582 = vmatprep.subr.mxu0 0.0
  %583 = vmatpush1.msra.mxu0 0.0
  %584 = vmatprep.subr.mxu0 0.0
  %585 = vmatpush1.msra.mxu0 0.0
  %586 = vmatprep.subr.mxu0 0.0
  %587 = vmatpush1.msra.mxu0 0.0
  %588 = vmatprep.mubr.f32.mxu0 0.0
  %589 = vmatmul.mubr.f32.gmra.mrb[0].mxu0 %v522
  %v590 = vpop.f32.mrb[0].mxu0
  %v591 = vadd.f32 0.0, %v590
  %v592 = vpop.f32.mrb[0].mxu0
  %v593 = vadd.f32 0.0, %v592
  %594 = vdwg.mxu0
  %v596 = vrot.slane %v591, 4
  %v598 = vadd.f32 %v116, %v596
  %v599 = vxor.u32 %v598, 2147483648
  %v600 = vmul.f32 %v599, 1.442695
  %v601 = vpow.pop %v600
  %v602 = vadd.f32 %v601, 1.0
  %v603 = vrcp.pop %v602
  %v604 = vmul.f32 1.0, %v603
  %v605 = vadd.f32 %v591, %v231
  %v607 = vrot.slane %v605, 4
  %608 = vrot.lane.b32.xlu0 %v607, 64
  %v609 = vpop.permute.xlu0 %608
  %v611 = vmul.f32 %v604, %v609
  %613 = vrot.lane.b32.xlu0 %v611, 64
  %v614 = vpop.permute.xlu0 %613
  %v616 = vadd.f32 %v116, %v614
  %v617 = vtanh.pop %v616
  %v618 = vsub.f32 1.0, %v604
  %620 = vrot.lane.b32.xlu0 %v617, 96
  %v621 = vpop.permute.xlu0 %620
  %v623 = vmul.f32 %v618, %v621
  %v624 = vrot.slane %v493, 6
  %625 = vrot.lane.b32.xlu0 %v624, 32
  %v626 = vpop.permute.xlu0 %625
  %v628 = vmul.f32 %v604, %v626
  %v629 = vadd.f32 %v623, %v628
  %v630 = vrot.slane %v591, 6
  %v632 = vadd.f32 %v122, %v630
  %v633 = vxor.u32 %v632, 2147483648
  %v634 = vmul.f32 %v633, 1.442695
  %v635 = vpow.pop %v634
  %v636 = vadd.f32 %v635, 1.0
  %v637 = vrcp.pop %v636
  %v638 = vmul.f32 1.0, %v637
  %v640 = vrot.slane %v593, 6
  %v642 = vadd.f32 %v124, %v640
  %v643 = vxor.u32 %v642, 2147483648
  %v644 = vmul.f32 %v643, 1.442695
  %v645 = vpow.pop %v644
  %v646 = vadd.f32 %v645, 1.0
  %v647 = vrcp.pop %v646
  %v648 = vmul.f32 1.0, %v647
  %v649 = vadd.f32 %v593, %v229
  %v651 = vrot.slane %v649, 6
  %652 = vrot.lane.b32.xlu0 %v651, 64
  %v653 = vpop.permute.xlu0 %652
  %v655 = vmul.f32 %v638, %v653
  %657 = vrot.lane.b32.xlu0 %v655, 64
  %v658 = vpop.permute.xlu0 %657
  %v660 = vadd.f32 %v124, %v658
  %v661 = vtanh.pop %v660
  %v662 = vsub.f32 1.0, %v648
  %664 = vrot.lane.b32.xlu0 %v661, 96
  %v665 = vpop.permute.xlu0 %664
  %v667 = vmul.f32 %v662, %v665
  %668 = vrot.lane.b32.xlu0 %v493, 96
  %v669 = vpop.permute.xlu0 %668
  %v671 = vmul.f32 %v648, %v669
  %v672 = vadd.f32 %v667, %v671
  %674 = vrot.lane.b32.xlu0 %v629, 96
  %v675 = vpop.permute.xlu0 %674
  %v678 = vrot.slane %v672, 6
  %679 = vrot.lane.b32.xlu0 %v678, 32
  %v680 = vpop.permute.xlu0 %679
  %v682 = vsel %vm42, %v675, %v680
  %v683 = vcombine.high %v629, %v629
  %v685 = vunpack.c.l.s4 1983009808
  %v686 = vunpack.c.0.s8 %v685
  %v687 = vlaneseq
  %v688 = vshrl.u32 %v687, 7
  %v689 = vsub.s32 %v686, %v688
  %v690 = vrot.slane %v683, %v689
  %691 = vrot.lane.b32.xlu0 %v690, 96
  %v692 = vpop.permute.xlu0 %691
  %694 = vst.msk [vmem:[%s5 + $0x2] sm:$0x3] %vm315, %v692
  %v696 = vunpack.c.l.s4 1983009808
  %v697 = vunpack.c.0.s8 %v696
  %v698 = vlaneseq
  %v699 = vshrl.u32 %v698, 7
  %v700 = vsub.s32 %v697, %v699
  %v701 = vrot.slane %v672, %v700
  %v702 = vcombine.high %v701, %v701
  %703 = vrot.lane.b32.xlu0 %v702, 96
  %v704 = vpop.permute.xlu0 %703
  %706 = vst.msk [vmem:[%s5 + $0x4] sm:$0x3] %vm329, %v704
  %v708 = vrot.slane %v682, 4
  %v709 = vsel %vm143, %v708, 0
  %711 = vmatprep.subr.mxu0 %v127
  %712 = vmatpush1.msra.mxu0 %v126
  %713 = vmatprep.subr.mxu0 %v129
  %714 = vmatpush1.msra.mxu0 %v128
  %715 = vmatprep.subr.mxu0 %v131
  %716 = vmatpush1.msra.mxu0 %v130
  %717 = vmatprep.subr.mxu0 %v133
  %718 = vmatpush1.msra.mxu0 %v132
  %719 = vmatprep.subr.mxu0 %v135
  %720 = vmatpush1.msra.mxu0 %v134
  %721 = vmatprep.subr.mxu0 %v137
  %722 = vmatpush1.msra.mxu0 %v136
  %723 = vmatprep.subr.mxu0 %v139
  %724 = vmatpush1.msra.mxu0 %v138
  %725 = vmatprep.subr.mxu0 %v141
  %726 = vmatpush1.msra.mxu0 %v140
  %727 = vmatprep.subr.mxu0 0.0
  %728 = vmatpush1.msra.mxu0 0.0
  %729 = vmatprep.subr.mxu0 0.0
  %730 = vmatpush1.msra.mxu0 0.0
  %731 = vmatprep.subr.mxu0 0.0
  %732 = vmatpush1.msra.mxu0 0.0
  %733 = vmatprep.subr.mxu0 0.0
  %734 = vmatpush1.msra.mxu0 0.0
  %735 = vmatprep.subr.mxu0 0.0
  %736 = vmatpush1.msra.mxu0 0.0
  %737 = vmatprep.subr.mxu0 0.0
  %738 = vmatpush1.msra.mxu0 0.0
  %739 = vmatprep.subr.mxu0 0.0
  %740 = vmatpush1.msra.mxu0 0.0
  %741 = vmatprep.subr.mxu0 0.0
  %742 = vmatpush1.msra.mxu0 0.0
  %743 = vmatprep.subr.mxu0 0.0
  %744 = vmatpush1.msra.mxu0 0.0
  %745 = vmatprep.subr.mxu0 0.0
  %746 = vmatpush1.msra.mxu0 0.0
  %747 = vmatprep.subr.mxu0 0.0
  %748 = vmatpush1.msra.mxu0 0.0
  %749 = vmatprep.subr.mxu0 0.0
  %750 = vmatpush1.msra.mxu0 0.0
  %751 = vmatprep.subr.mxu0 0.0
  %752 = vmatpush1.msra.mxu0 0.0
  %753 = vmatprep.subr.mxu0 0.0
  %754 = vmatpush1.msra.mxu0 0.0
  %755 = vmatprep.subr.mxu0 0.0
  %756 = vmatpush1.msra.mxu0 0.0
  %757 = vmatprep.subr.mxu0 0.0
  %758 = vmatpush1.msra.mxu0 0.0
  %759 = vmatprep.subr.mxu0 0.0
  %760 = vmatpush1.msra.mxu0 0.0
  %761 = vmatprep.subr.mxu0 0.0
  %762 = vmatpush1.msra.mxu0 0.0
  %763 = vmatprep.subr.mxu0 0.0
  %764 = vmatpush1.msra.mxu0 0.0
  %765 = vmatprep.subr.mxu0 0.0
  %766 = vmatpush1.msra.mxu0 0.0
  %767 = vmatprep.subr.mxu0 0.0
  %768 = vmatpush1.msra.mxu0 0.0
  %769 = vmatprep.subr.mxu0 0.0
  %770 = vmatpush1.msra.mxu0 0.0
  %771 = vmatprep.subr.mxu0 0.0
  %772 = vmatpush1.msra.mxu0 0.0
  %773 = vmatprep.subr.mxu0 0.0
  %774 = vmatpush1.msra.mxu0 0.0
  %775 = vmatprep.mubr.f32.mxu0 0.0
  %776 = vmatmul.mubr.f32.gmra.mrb[0].mxu0 %v709
  %v777 = vpop.f32.mrb[0].mxu0
  %v778 = vadd.f32 0.0, %v777
  %v779 = vpop.f32.mrb[0].mxu0
  %v780 = vadd.f32 0.0, %v779
  %781 = vdwg.mxu0
  %v783 = vrot.slane %v778, 2
  %v785 = vadd.f32 %v116, %v783
  %v786 = vxor.u32 %v785, 2147483648
  %v787 = vmul.f32 %v786, 1.442695
  %v788 = vpow.pop %v787
  %v789 = vadd.f32 %v788, 1.0
  %v790 = vrcp.pop %v789
  %v791 = vmul.f32 1.0, %v790
  %v792 = vadd.f32 %v778, %v231
  %v794 = vrot.slane %v792, 2
  %795 = vrot.lane.b32.xlu0 %v794, 64
  %v796 = vpop.permute.xlu0 %795
  %v798 = vmul.f32 %v791, %v796
  %800 = vrot.lane.b32.xlu0 %v798, 64
  %v801 = vpop.permute.xlu0 %800
  %v803 = vadd.f32 %v116, %v801
  %v804 = vtanh.pop %v803
  %v805 = vsub.f32 1.0, %v791
  %807 = vrot.lane.b32.xlu0 %v804, 96
  %v808 = vpop.permute.xlu0 %807
  %v810 = vmul.f32 %v805, %v808
  %v811 = vrot.slane %v682, 6
  %812 = vrot.lane.b32.xlu0 %v811, 32
  %v813 = vpop.permute.xlu0 %812
  %v815 = vmul.f32 %v791, %v813
  %v816 = vadd.f32 %v810, %v815
  %v817 = vadd.f32 %v122, %v778
  %v818 = vxor.u32 %v817, 2147483648
  %v819 = vmul.f32 %v818, 1.442695
  %v820 = vpow.pop %v819
  %v821 = vadd.f32 %v820, 1.0
  %v822 = vrcp.pop %v821
  %v823 = vmul.f32 1.0, %v822
  %v824 = vadd.f32 %v124, %v780
  %v825 = vxor.u32 %v824, 2147483648
  %v826 = vmul.f32 %v825, 1.442695
  %v827 = vpow.pop %v826
  %v828 = vadd.f32 %v827, 1.0
  %v829 = vrcp.pop %v828
  %v830 = vmul.f32 1.0, %v829
  %v831 = vadd.f32 %v780, %v229
  %833 = vrot.lane.b32.xlu0 %v831, 64
  %v834 = vpop.permute.xlu0 %833
  %v836 = vmul.f32 %v823, %v834
  %838 = vrot.lane.b32.xlu0 %v836, 64
  %v839 = vpop.permute.xlu0 %838
  %v841 = vadd.f32 %v124, %v839
  %v842 = vtanh.pop %v841
  %v843 = vsub.f32 1.0, %v830
  %845 = vrot.lane.b32.xlu0 %v842, 96
  %v846 = vpop.permute.xlu0 %845
  %v848 = vmul.f32 %v843, %v846
  %849 = vrot.lane.b32.xlu0 %v708, 96
  %v850 = vpop.permute.xlu0 %849
  %v852 = vmul.f32 %v830, %v850
  %v853 = vadd.f32 %v848, %v852
  %855 = vrot.lane.b32.xlu0 %v816, 96
  %v856 = vpop.permute.xlu0 %855
  %v859 = vrot.slane %v853, 2
  %860 = vrot.lane.b32.xlu0 %v859, 32
  %v861 = vpop.permute.xlu0 %860
  %v863 = vsel %vm42, %v856, %v861
  %v864 = vcombine.high %v816, %v816
  %v866 = vunpack.c.l.s4 1983009808
  %v867 = vunpack.c.0.s8 %v866
  %v868 = vlaneseq
  %v869 = vshrl.u32 %v868, 7
  %v870 = vsub.s32 %v867, %v869
  %v871 = vrot.slane %v864, %v870
  %v872 = vcombine.high %v871, %v871
  %873 = vrot.lane.b32.xlu0 %v872, 32
  %v874 = vpop.permute.xlu0 %873
  %876 = vst.msk [vmem:[%s5 + $0x2] sm:$0x3] %vm505, %v874
  %v878 = vunpack.c.l.s4 1983009808
  %v879 = vunpack.c.0.s8 %v878
  %v880 = vlaneseq
  %v881 = vshrl.u32 %v880, 7
  %v882 = vsub.s32 %v879, %v881
  %v883 = vrot.slane %v853, %v882
  %884 = vrot.lane.b32.xlu0 %v883, 32
  %v885 = vpop.permute.xlu0 %884
  %887 = vst.msk [vmem:[%s5 + $0x4] sm:$0x3] %vm518, %v885
  %v889 = vrot.slane %v863, 6
  %v890 = vsel %vm143, %v889, 0
  %892 = vmatprep.subr.mxu0 %v127
  %893 = vmatpush1.msra.mxu0 %v126
  %894 = vmatprep.subr.mxu0 %v129
  %895 = vmatpush1.msra.mxu0 %v128
  %896 = vmatprep.subr.mxu0 %v131
  %897 = vmatpush1.msra.mxu0 %v130
  %898 = vmatprep.subr.mxu0 %v133
  %899 = vmatpush1.msra.mxu0 %v132
  %900 = vmatprep.subr.mxu0 %v135
  %901 = vmatpush1.msra.mxu0 %v134
  %902 = vmatprep.subr.mxu0 %v137
  %903 = vmatpush1.msra.mxu0 %v136
  %904 = vmatprep.subr.mxu0 %v139
  %905 = vmatpush1.msra.mxu0 %v138
  %906 = vmatprep.subr.mxu0 %v141
  %907 = vmatpush1.msra.mxu0 %v140
  %908 = vmatprep.subr.mxu0 0.0
  %909 = vmatpush1.msra.mxu0 0.0
  %910 = vmatprep.subr.mxu0 0.0
  %911 = vmatpush1.msra.mxu0 0.0
  %912 = vmatprep.subr.mxu0 0.0
  %913 = vmatpush1.msra.mxu0 0.0
  %914 = vmatprep.subr.mxu0 0.0
  %915 = vmatpush1.msra.mxu0 0.0
  %916 = vmatprep.subr.mxu0 0.0
  %917 = vmatpush1.msra.mxu0 0.0
  %918 = vmatprep.subr.mxu0 0.0
  %919 = vmatpush1.msra.mxu0 0.0
  %920 = vmatprep.subr.mxu0 0.0
  %921 = vmatpush1.msra.mxu0 0.0
  %922 = vmatprep.subr.mxu0 0.0
  %923 = vmatpush1.msra.mxu0 0.0
  %924 = vmatprep.subr.mxu0 0.0
  %925 = vmatpush1.msra.mxu0 0.0
  %926 = vmatprep.subr.mxu0 0.0
  %927 = vmatpush1.msra.mxu0 0.0
  %928 = vmatprep.subr.mxu0 0.0
  %929 = vmatpush1.msra.mxu0 0.0
  %930 = vmatprep.subr.mxu0 0.0
  %931 = vmatpush1.msra.mxu0 0.0
  %932 = vmatprep.subr.mxu0 0.0
  %933 = vmatpush1.msra.mxu0 0.0
  %934 = vmatprep.subr.mxu0 0.0
  %935 = vmatpush1.msra.mxu0 0.0
  %936 = vmatprep.subr.mxu0 0.0
  %937 = vmatpush1.msra.mxu0 0.0
  %938 = vmatprep.subr.mxu0 0.0
  %939 = vmatpush1.msra.mxu0 0.0
  %940 = vmatprep.subr.mxu0 0.0
  %941 = vmatpush1.msra.mxu0 0.0
  %942 = vmatprep.subr.mxu0 0.0
  %943 = vmatpush1.msra.mxu0 0.0
  %944 = vmatprep.subr.mxu0 0.0
  %945 = vmatpush1.msra.mxu0 0.0
  %946 = vmatprep.subr.mxu0 0.0
  %947 = vmatpush1.msra.mxu0 0.0
  %948 = vmatprep.subr.mxu0 0.0
  %949 = vmatpush1.msra.mxu0 0.0
  %950 = vmatprep.subr.mxu0 0.0
  %951 = vmatpush1.msra.mxu0 0.0
  %952 = vmatprep.subr.mxu0 0.0
  %953 = vmatpush1.msra.mxu0 0.0
  %954 = vmatprep.subr.mxu0 0.0
  %955 = vmatpush1.msra.mxu0 0.0
  %956 = vmatprep.mubr.f32.mxu0 0.0
  %957 = vmatmul.mubr.f32.gmra.mrb[0].mxu0 %v890
  %v958 = vpop.f32.mrb[0].mxu0
  %v959 = vadd.f32 0.0, %v958
  %v960 = vpop.f32.mrb[0].mxu0
  %v961 = vadd.f32 0.0, %v960
  %962 = vdwg.mxu0
  %v963 = vadd.f32 %v122, %v959
  %v964 = vxor.u32 %v963, 2147483648
  %v965 = vmul.f32 %v964, 1.442695
  %v966 = vpow.pop %v965
  %v967 = vadd.f32 %v966, 1.0
  %v968 = vrcp.pop %v967
  %v969 = vmul.f32 1.0, %v968
  %v970 = vadd.f32 %v959, %v231
  %972 = vrot.lane.b32.xlu0 %v970, 64
  %v973 = vpop.permute.xlu0 %972
  %v975 = vmul.f32 %v969, %v973
  %977 = vrot.lane.b32.xlu0 %v975, 64
  %v978 = vpop.permute.xlu0 %977
  %v980 = vadd.f32 %v122, %v978
  %v981 = vtanh.pop %v980
  %v982 = vsub.f32 1.0, %v969
  %984 = vrot.lane.b32.xlu0 %v981, 96
  %v985 = vpop.permute.xlu0 %984
  %v987 = vmul.f32 %v982, %v985
  %988 = vrot.lane.b32.xlu0 %v889, 32
  %v989 = vpop.permute.xlu0 %988
  %v991 = vmul.f32 %v969, %v989
  %v992 = vadd.f32 %v987, %v991
  %v994 = vrot.slane %v959, 2
  %v996 = vadd.f32 %v116, %v994
  %v997 = vxor.u32 %v996, 2147483648
  %v998 = vmul.f32 %v997, 1.442695
  %v999 = vpow.pop %v998
  %v1000 = vadd.f32 %v999, 1.0
  %v1001 = vrcp.pop %v1000
  %v1002 = vmul.f32 1.0, %v1001
  %v1004 = vrot.slane %v961, 2
  %v1006 = vadd.f32 %v118, %v1004
  %v1007 = vxor.u32 %v1006, 2147483648
  %v1008 = vmul.f32 %v1007, 1.442695
  %v1009 = vpow.pop %v1008
  %v1010 = vadd.f32 %v1009, 1.0
  %v1011 = vrcp.pop %v1010
  %v1012 = vmul.f32 1.0, %v1011
  %v1013 = vadd.f32 %v961, %v229
  %v1015 = vrot.slane %v1013, 2
  %1016 = vrot.lane.b32.xlu0 %v1015, 64
  %v1017 = vpop.permute.xlu0 %1016
  %v1019 = vmul.f32 %v1002, %v1017
  %1021 = vrot.lane.b32.xlu0 %v1019, 64
  %v1022 = vpop.permute.xlu0 %1021
  %v1024 = vadd.f32 %v118, %v1022
  %v1025 = vtanh.pop %v1024
  %v1026 = vsub.f32 1.0, %v1012
  %1028 = vrot.lane.b32.xlu0 %v1025, 96
  %v1029 = vpop.permute.xlu0 %1028
  %v1031 = vmul.f32 %v1026, %v1029
  %1032 = vrot.lane.b32.xlu0 %v863, 96
  %v1033 = vpop.permute.xlu0 %1032
  %v1035 = vmul.f32 %v1012, %v1033
  %v1036 = vadd.f32 %v1031, %v1035
  %1038 = vrot.lane.b32.xlu0 %v992, 96
  %v1039 = vpop.permute.xlu0 %1038
  %v1042 = vrot.slane %v1036, 6
  %1043 = vrot.lane.b32.xlu0 %v1042, 32
  %v1044 = vpop.permute.xlu0 %1043
  %v1046 = vsel %vm42, %v1039, %v1044
  %v1048 = vunpack.c.l.s4 1983009808
  %v1049 = vunpack.c.0.s8 %v1048
  %v1050 = vlaneseq
  %v1051 = vshrl.u32 %v1050, 7
  %v1052 = vsub.s32 %v1049, %v1051
  %v1053 = vrot.slane %v992, %v1052
  %1054 = vrot.lane.b32.xlu0 %v1053, 96
  %v1055 = vpop.permute.xlu0 %1054
  %1057 = vst.msk [vmem:[%s5 + $0x4] sm:$0x3] %vm315, %v1055
  %v1058 = vcombine.high %v1036, %v1036
  %v1060 = vunpack.c.l.s4 1983009808
  %v1061 = vunpack.c.0.s8 %v1060
  %v1062 = vlaneseq
  %v1063 = vshrl.u32 %v1062, 7
  %v1064 = vsub.s32 %v1061, %v1063
  %v1065 = vrot.slane %v1058, %v1064
  %v1066 = vcombine.high %v1065, %v1065
  %1067 = vrot.lane.b32.xlu0 %v1066, 96
  %v1068 = vpop.permute.xlu0 %1067
  %1070 = vst.msk [vmem:[%s5 + $0x2] sm:$0x3] %vm329, %v1068
  %v1072 = vsel %vm143, %v1046, 0
  %1074 = vmatprep.subr.mxu0 %v127
  %1075 = vmatpush1.msra.mxu0 %v126
  %1076 = vmatprep.subr.mxu0 %v129
  %1077 = vmatpush1.msra.mxu0 %v128
  %1078 = vmatprep.subr.mxu0 %v131
  %1079 = vmatpush1.msra.mxu0 %v130
  %1080 = vmatprep.subr.mxu0 %v133
  %1081 = vmatpush1.msra.mxu0 %v132
  %1082 = vmatprep.subr.mxu0 %v135
  %1083 = vmatpush1.msra.mxu0 %v134
  %1084 = vmatprep.subr.mxu0 %v137
  %1085 = vmatpush1.msra.mxu0 %v136
  %1086 = vmatprep.subr.mxu0 %v139
  %1087 = vmatpush1.msra.mxu0 %v138
  %1088 = vmatprep.subr.mxu0 %v141
  %1089 = vmatpush1.msra.mxu0 %v140
  %1090 = vmatprep.subr.mxu0 0.0
  %1091 = vmatpush1.msra.mxu0 0.0
  %1092 = vmatprep.subr.mxu0 0.0
  %1093 = vmatpush1.msra.mxu0 0.0
  %1094 = vmatprep.subr.mxu0 0.0
  %1095 = vmatpush1.msra.mxu0 0.0
  %1096 = vmatprep.subr.mxu0 0.0
  %1097 = vmatpush1.msra.mxu0 0.0
  %1098 = vmatprep.subr.mxu0 0.0
  %1099 = vmatpush1.msra.mxu0 0.0
  %1100 = vmatprep.subr.mxu0 0.0
  %1101 = vmatpush1.msra.mxu0 0.0
  %1102 = vmatprep.subr.mxu0 0.0
  %1103 = vmatpush1.msra.mxu0 0.0
  %1104 = vmatprep.subr.mxu0 0.0
  %1105 = vmatpush1.msra.mxu0 0.0
  %1106 = vmatprep.subr.mxu0 0.0
  %1107 = vmatpush1.msra.mxu0 0.0
  %1108 = vmatprep.subr.mxu0 0.0
  %1109 = vmatpush1.msra.mxu0 0.0
  %1110 = vmatprep.subr.mxu0 0.0
  %1111 = vmatpush1.msra.mxu0 0.0
  %1112 = vmatprep.subr.mxu0 0.0
  %1113 = vmatpush1.msra.mxu0 0.0
  %1114 = vmatprep.subr.mxu0 0.0
  %1115 = vmatpush1.msra.mxu0 0.0
  %1116 = vmatprep.subr.mxu0 0.0
  %1117 = vmatpush1.msra.mxu0 0.0
  %1118 = vmatprep.subr.mxu0 0.0
  %1119 = vmatpush1.msra.mxu0 0.0
  %1120 = vmatprep.subr.mxu0 0.0
  %1121 = vmatpush1.msra.mxu0 0.0
  %1122 = vmatprep.subr.mxu0 0.0
  %1123 = vmatpush1.msra.mxu0 0.0
  %1124 = vmatprep.subr.mxu0 0.0
  %1125 = vmatpush1.msra.mxu0 0.0
  %1126 = vmatprep.subr.mxu0 0.0
  %1127 = vmatpush1.msra.mxu0 0.0
  %1128 = vmatprep.subr.mxu0 0.0
  %1129 = vmatpush1.msra.mxu0 0.0
  %1130 = vmatprep.subr.mxu0 0.0
  %1131 = vmatpush1.msra.mxu0 0.0
  %1132 = vmatprep.subr.mxu0 0.0
  %1133 = vmatpush1.msra.mxu0 0.0
  %1134 = vmatprep.subr.mxu0 0.0
  %1135 = vmatpush1.msra.mxu0 0.0
  %1136 = vmatprep.subr.mxu0 0.0
  %1137 = vmatpush1.msra.mxu0 0.0
  %1138 = vmatprep.mubr.f32.mxu0 0.0
  %1139 = vmatmul.mubr.f32.gmra.mrb[0].mxu0 %v1072
  %v1140 = vpop.f32.mrb[0].mxu0
  %v1141 = vadd.f32 0.0, %v1140
  %v1142 = vpop.f32.mrb[0].mxu0
  %v1143 = vadd.f32 0.0, %v1142
  %1144 = vdwg.mxu0
  %v1146 = vrot.slane %v1141, 6
  %v1148 = vadd.f32 %v122, %v1146
  %v1149 = vxor.u32 %v1148, 2147483648
  %v1150 = vmul.f32 %v1149, 1.442695
  %v1151 = vpow.pop %v1150
  %v1152 = vadd.f32 %v1151, 1.0
  %v1153 = vrcp.pop %v1152
  %v1154 = vmul.f32 1.0, %v1153
  %v1155 = vadd.f32 %v1141, %v231
  %v1157 = vrot.slane %v1155, 6
  %1158 = vrot.lane.b32.xlu0 %v1157, 64
  %v1159 = vpop.permute.xlu0 %1158
  %v1161 = vmul.f32 %v1154, %v1159
  %1163 = vrot.lane.b32.xlu0 %v1161, 64
  %v1164 = vpop.permute.xlu0 %1163
  %v1166 = vadd.f32 %v122, %v1164
  %v1167 = vtanh.pop %v1166
  %v1168 = vsub.f32 1.0, %v1154
  %1170 = vrot.lane.b32.xlu0 %v1167, 96
  %v1171 = vpop.permute.xlu0 %1170
  %v1173 = vmul.f32 %v1168, %v1171
  %v1174 = vrot.slane %v1046, 6
  %1175 = vrot.lane.b32.xlu0 %v1174, 32
  %v1176 = vpop.permute.xlu0 %1175
  %v1178 = vmul.f32 %v1154, %v1176
  %v1179 = vadd.f32 %v1173, %v1178
  %v1180 = vrot.slane %v1141, 4
  %v1182 = vadd.f32 %v116, %v1180
  %v1183 = vxor.u32 %v1182, 2147483648
  %v1184 = vmul.f32 %v1183, 1.442695
  %v1185 = vpow.pop %v1184
  %v1186 = vadd.f32 %v1185, 1.0
  %v1187 = vrcp.pop %v1186
  %v1188 = vmul.f32 1.0, %v1187
  %v1190 = vrot.slane %v1143, 4
  %v1192 = vadd.f32 %v118, %v1190
  %v1193 = vxor.u32 %v1192, 2147483648
  %v1194 = vmul.f32 %v1193, 1.442695
  %v1195 = vpow.pop %v1194
  %v1196 = vadd.f32 %v1195, 1.0
  %v1197 = vrcp.pop %v1196
  %v1198 = vmul.f32 1.0, %v1197
  %v1199 = vadd.f32 %v1143, %v229
  %v1201 = vrot.slane %v1199, 4
  %1202 = vrot.lane.b32.xlu0 %v1201, 64
  %v1203 = vpop.permute.xlu0 %1202
  %v1205 = vmul.f32 %v1188, %v1203
  %1207 = vrot.lane.b32.xlu0 %v1205, 64
  %v1208 = vpop.permute.xlu0 %1207
  %v1210 = vadd.f32 %v118, %v1208
  %v1211 = vtanh.pop %v1210
  %v1212 = vsub.f32 1.0, %v1198
  %1214 = vrot.lane.b32.xlu0 %v1211, 96
  %v1215 = vpop.permute.xlu0 %1214
  %v1217 = vmul.f32 %v1212, %v1215
  %v1218 = vrot.slane %v1046, 4
  %1219 = vrot.lane.b32.xlu0 %v1218, 96
  %v1220 = vpop.permute.xlu0 %1219
  %v1222 = vmul.f32 %v1198, %v1220
  %v1223 = vadd.f32 %v1217, %v1222
  %1225 = vrot.lane.b32.xlu0 %v1179, 96
  %v1226 = vpop.permute.xlu0 %1225
  %v1229 = vrot.slane %v1223, 2
  %1230 = vrot.lane.b32.xlu0 %v1229, 32
  %v1231 = vpop.permute.xlu0 %1230
  %v1233 = vsel %vm42, %v1226, %v1231
  %v1235 = vunpack.c.l.s4 1983009808
  %v1236 = vunpack.c.0.s8 %v1235
  %v1237 = vlaneseq
  %v1238 = vshrl.u32 %v1237, 7
  %v1239 = vsub.s32 %v1236, %v1238
  %v1240 = vrot.slane %v1179, %v1239
  %v1241 = vcombine.high %v1240, %v1240
  %1242 = vrot.lane.b32.xlu0 %v1241, 32
  %v1243 = vpop.permute.xlu0 %1242
  %1245 = vst.msk [vmem:[%s5 + $0x4] sm:$0x3] %vm505, %v1243
  %v1246 = vcombine.high %v1223, %v1223
  %v1248 = vunpack.c.l.s4 1983009808
  %v1249 = vunpack.c.0.s8 %v1248
  %v1250 = vlaneseq
  %v1251 = vshrl.u32 %v1250, 7
  %v1252 = vsub.s32 %v1249, %v1251
  %v1253 = vrot.slane %v1246, %v1252
  %1254 = vrot.lane.b32.xlu0 %v1253, 32
  %v1255 = vpop.permute.xlu0 %1254
  %1257 = vst.msk [vmem:[%s5 + $0x2] sm:$0x3] %vm518, %v1255
  %v1259 = vrot.slane %v1233, 2
  %v1260 = vsel %vm143, %v1259, 0
  %1262 = vmatprep.subr.mxu0 %v127
  %1263 = vmatpush1.msra.mxu0 %v126
  %1264 = vmatprep.subr.mxu0 %v129
  %1265 = vmatpush1.msra.mxu0 %v128
  %1266 = vmatprep.subr.mxu0 %v131
  %1267 = vmatpush1.msra.mxu0 %v130
  %1268 = vmatprep.subr.mxu0 %v133
  %1269 = vmatpush1.msra.mxu0 %v132
  %1270 = vmatprep.subr.mxu0 %v135
  %1271 = vmatpush1.msra.mxu0 %v134
  %1272 = vmatprep.subr.mxu0 %v137
  %1273 = vmatpush1.msra.mxu0 %v136
  %1274 = vmatprep.subr.mxu0 %v139
  %1275 = vmatpush1.msra.mxu0 %v138
  %1276 = vmatprep.subr.mxu0 %v141
  %1277 = vmatpush1.msra.mxu0 %v140
  %1278 = vmatprep.subr.mxu0 0.0
  %1279 = vmatpush1.msra.mxu0 0.0
  %1280 = vmatprep.subr.mxu0 0.0
  %1281 = vmatpush1.msra.mxu0 0.0
  %1282 = vmatprep.subr.mxu0 0.0
  %1283 = vmatpush1.msra.mxu0 0.0
  %1284 = vmatprep.subr.mxu0 0.0
  %1285 = vmatpush1.msra.mxu0 0.0
  %1286 = vmatprep.subr.mxu0 0.0
  %1287 = vmatpush1.msra.mxu0 0.0
  %1288 = vmatprep.subr.mxu0 0.0
  %1289 = vmatpush1.msra.mxu0 0.0
  %1290 = vmatprep.subr.mxu0 0.0
  %1291 = vmatpush1.msra.mxu0 0.0
  %1292 = vmatprep.subr.mxu0 0.0
  %1293 = vmatpush1.msra.mxu0 0.0
  %1294 = vmatprep.subr.mxu0 0.0
  %1295 = vmatpush1.msra.mxu0 0.0
  %1296 = vmatprep.subr.mxu0 0.0
  %1297 = vmatpush1.msra.mxu0 0.0
  %1298 = vmatprep.subr.mxu0 0.0
  %1299 = vmatpush1.msra.mxu0 0.0
  %1300 = vmatprep.subr.mxu0 0.0
  %1301 = vmatpush1.msra.mxu0 0.0
  %1302 = vmatprep.subr.mxu0 0.0
  %1303 = vmatpush1.msra.mxu0 0.0
  %1304 = vmatprep.subr.mxu0 0.0
  %1305 = vmatpush1.msra.mxu0 0.0
  %1306 = vmatprep.subr.mxu0 0.0
  %1307 = vmatpush1.msra.mxu0 0.0
  %1308 = vmatprep.subr.mxu0 0.0
  %1309 = vmatpush1.msra.mxu0 0.0
  %1310 = vmatprep.subr.mxu0 0.0
  %1311 = vmatpush1.msra.mxu0 0.0
  %1312 = vmatprep.subr.mxu0 0.0
  %1313 = vmatpush1.msra.mxu0 0.0
  %1314 = vmatprep.subr.mxu0 0.0
  %1315 = vmatpush1.msra.mxu0 0.0
  %1316 = vmatprep.subr.mxu0 0.0
  %1317 = vmatpush1.msra.mxu0 0.0
  %1318 = vmatprep.subr.mxu0 0.0
  %1319 = vmatpush1.msra.mxu0 0.0
  %1320 = vmatprep.subr.mxu0 0.0
  %1321 = vmatpush1.msra.mxu0 0.0
  %1322 = vmatprep.subr.mxu0 0.0
  %1323 = vmatpush1.msra.mxu0 0.0
  %1324 = vmatprep.subr.mxu0 0.0
  %1325 = vmatpush1.msra.mxu0 0.0
  %1326 = vmatprep.mubr.f32.mxu0 0.0
  %1327 = vmatmul.mubr.f32.gmra.mrb[0].mxu0 %v1260
  %v1328 = vpop.f32.mrb[0].mxu0
  %v1329 = vadd.f32 0.0, %v1328
  %v1330 = vpop.f32.mrb[0].mxu0
  %v1331 = vadd.f32 0.0, %v1330
  %1332 = vdwg.mxu0
  %v1334 = vrot.slane %v1329, 4
  %v1336 = vadd.f32 %v122, %v1334
  %v1337 = vxor.u32 %v1336, 2147483648
  %v1338 = vmul.f32 %v1337, 1.442695
  %v1339 = vpow.pop %v1338
  %v1340 = vadd.f32 %v1339, 1.0
  %v1341 = vrcp.pop %v1340
  %v1342 = vmul.f32 1.0, %v1341
  %v1343 = vadd.f32 %v1329, %v231
  %v1345 = vrot.slane %v1343, 4
  %1346 = vrot.lane.b32.xlu0 %v1345, 64
  %v1347 = vpop.permute.xlu0 %1346
  %v1349 = vmul.f32 %v1342, %v1347
  %1351 = vrot.lane.b32.xlu0 %v1349, 64
  %v1352 = vpop.permute.xlu0 %1351
  %v1354 = vadd.f32 %v122, %v1352
  %v1355 = vtanh.pop %v1354
  %v1356 = vsub.f32 1.0, %v1342
  %1358 = vrot.lane.b32.xlu0 %v1355, 96
  %v1359 = vpop.permute.xlu0 %1358
  %v1361 = vmul.f32 %v1356, %v1359
  %v1362 = vrot.slane %v1233, 6
  %1363 = vrot.lane.b32.xlu0 %v1362, 32
  %v1364 = vpop.permute.xlu0 %1363
  %v1366 = vmul.f32 %v1342, %v1364
  %v1367 = vadd.f32 %v1361, %v1366
  %v1368 = vrot.slane %v1329, 6
  %v1370 = vadd.f32 %v116, %v1368
  %v1371 = vxor.u32 %v1370, 2147483648
  %v1372 = vmul.f32 %v1371, 1.442695
  %v1373 = vpow.pop %v1372
  %v1374 = vadd.f32 %v1373, 1.0
  %v1375 = vrcp.pop %v1374
  %v1376 = vmul.f32 1.0, %v1375
  %v1378 = vrot.slane %v1331, 6
  %v1380 = vadd.f32 %v118, %v1378
  %v1381 = vxor.u32 %v1380, 2147483648
  %v1382 = vmul.f32 %v1381, 1.442695
  %v1383 = vpow.pop %v1382
  %v1384 = vadd.f32 %v1383, 1.0
  %v1385 = vrcp.pop %v1384
  %v1386 = vmul.f32 1.0, %v1385
  %v1387 = vadd.f32 %v1331, %v229
  %v1389 = vrot.slane %v1387, 6
  %1390 = vrot.lane.b32.xlu0 %v1389, 64
  %v1391 = vpop.permute.xlu0 %1390
  %v1393 = vmul.f32 %v1376, %v1391
  %1395 = vrot.lane.b32.xlu0 %v1393, 64
  %v1396 = vpop.permute.xlu0 %1395
  %v1398 = vadd.f32 %v118, %v1396
  %v1399 = vtanh.pop %v1398
  %v1400 = vsub.f32 1.0, %v1386
  %1402 = vrot.lane.b32.xlu0 %v1399, 96
  %v1403 = vpop.permute.xlu0 %1402
  %v1405 = vmul.f32 %v1400, %v1403
  %1406 = vrot.lane.b32.xlu0 %v1233, 96
  %v1407 = vpop.permute.xlu0 %1406
  %v1409 = vmul.f32 %v1386, %v1407
  %v1410 = vadd.f32 %v1405, %v1409
  %1412 = vrot.lane.b32.xlu0 %v1367, 96
  %v1413 = vpop.permute.xlu0 %1412
  %v1416 = vrot.slane %v1410, 6
  %1417 = vrot.lane.b32.xlu0 %v1416, 32
  %v1418 = vpop.permute.xlu0 %1417
  %v1420 = vsel %vm42, %v1413, %v1418
  %v1421 = vcombine.high %v1367, %v1367
  %v1423 = vunpack.c.l.s4 1983009808
  %v1424 = vunpack.c.0.s8 %v1423
  %v1425 = vlaneseq
  %v1426 = vshrl.u32 %v1425, 7
  %v1427 = vsub.s32 %v1424, %v1426
  %v1428 = vrot.slane %v1421, %v1427
  %1429 = vrot.lane.b32.xlu0 %v1428, 96
  %v1430 = vpop.permute.xlu0 %1429
  %1432 = vst.msk [vmem:[%s5 + $0x6] sm:$0x3] %vm315, %v1430
  %v1434 = vunpack.c.l.s4 1983009808
  %v1435 = vunpack.c.0.s8 %v1434
  %v1436 = vlaneseq
  %v1437 = vshrl.u32 %v1436, 7
  %v1438 = vsub.s32 %v1435, %v1437
  %v1439 = vrot.slane %v1410, %v1438
  %v1440 = vcombine.high %v1439, %v1439
  %1441 = vrot.lane.b32.xlu0 %v1440, 96
  %v1442 = vpop.permute.xlu0 %1441
  %1444 = vst.msk [vmem:[%s5] sm:$0x3] %vm329, %v1442
  %v1446 = vrot.slane %v1420, 4
  %v1447 = vsel %vm143, %v1446, 0
  %1449 = vmatprep.subr.mxu0 %v127
  %1450 = vmatpush1.msra.mxu0 %v126
  %1451 = vmatprep.subr.mxu0 %v129
  %1452 = vmatpush1.msra.mxu0 %v128
  %1453 = vmatprep.subr.mxu0 %v131
  %1454 = vmatpush1.msra.mxu0 %v130
  %1455 = vmatprep.subr.mxu0 %v133
  %1456 = vmatpush1.msra.mxu0 %v132
  %1457 = vmatprep.subr.mxu0 %v135
  %1458 = vmatpush1.msra.mxu0 %v134
  %1459 = vmatprep.subr.mxu0 %v137
  %1460 = vmatpush1.msra.mxu0 %v136
  %1461 = vmatprep.subr.mxu0 %v139
  %1462 = vmatpush1.msra.mxu0 %v138
  %1463 = vmatprep.subr.mxu0 %v141
  %1464 = vmatpush1.msra.mxu0 %v140
  %1465 = vmatprep.subr.mxu0 0.0
  %1466 = vmatpush1.msra.mxu0 0.0
  %1467 = vmatprep.subr.mxu0 0.0
  %1468 = vmatpush1.msra.mxu0 0.0
  %1469 = vmatprep.subr.mxu0 0.0
  %1470 = vmatpush1.msra.mxu0 0.0
  %1471 = vmatprep.subr.mxu0 0.0
  %1472 = vmatpush1.msra.mxu0 0.0
  %1473 = vmatprep.subr.mxu0 0.0
  %1474 = vmatpush1.msra.mxu0 0.0
  %1475 = vmatprep.subr.mxu0 0.0
  %1476 = vmatpush1.msra.mxu0 0.0
  %1477 = vmatprep.subr.mxu0 0.0
  %1478 = vmatpush1.msra.mxu0 0.0
  %1479 = vmatprep.subr.mxu0 0.0
  %1480 = vmatpush1.msra.mxu0 0.0
  %1481 = vmatprep.subr.mxu0 0.0
  %1482 = vmatpush1.msra.mxu0 0.0
  %1483 = vmatprep.subr.mxu0 0.0
  %1484 = vmatpush1.msra.mxu0 0.0
  %1485 = vmatprep.subr.mxu0 0.0
  %1486 = vmatpush1.msra.mxu0 0.0
  %1487 = vmatprep.subr.mxu0 0.0
  %1488 = vmatpush1.msra.mxu0 0.0
  %1489 = vmatprep.subr.mxu0 0.0
  %1490 = vmatpush1.msra.mxu0 0.0
  %1491 = vmatprep.subr.mxu0 0.0
  %1492 = vmatpush1.msra.mxu0 0.0
  %1493 = vmatprep.subr.mxu0 0.0
  %1494 = vmatpush1.msra.mxu0 0.0
  %1495 = vmatprep.subr.mxu0 0.0
  %1496 = vmatpush1.msra.mxu0 0.0
  %1497 = vmatprep.subr.mxu0 0.0
  %1498 = vmatpush1.msra.mxu0 0.0
  %1499 = vmatprep.subr.mxu0 0.0
  %1500 = vmatpush1.msra.mxu0 0.0
  %1501 = vmatprep.subr.mxu0 0.0
  %1502 = vmatpush1.msra.mxu0 0.0
  %1503 = vmatprep.subr.mxu0 0.0
  %1504 = vmatpush1.msra.mxu0 0.0
  %1505 = vmatprep.subr.mxu0 0.0
  %1506 = vmatpush1.msra.mxu0 0.0
  %1507 = vmatprep.subr.mxu0 0.0
  %1508 = vmatpush1.msra.mxu0 0.0
  %1509 = vmatprep.subr.mxu0 0.0
  %1510 = vmatpush1.msra.mxu0 0.0
  %1511 = vmatprep.subr.mxu0 0.0
  %1512 = vmatpush1.msra.mxu0 0.0
  %1513 = vmatprep.mubr.f32.mxu0 0.0
  %1514 = vmatmul.mubr.f32.gmra.mrb[0].mxu0 %v1447
  %v1515 = vpop.f32.mrb[0].mxu0
  %v1516 = vadd.f32 0.0, %v1515
  %v1517 = vpop.f32.mrb[0].mxu0
  %v1518 = vadd.f32 0.0, %v1517
  %1519 = vdwg.mxu0
  %v1521 = vrot.slane %v1516, 2
  %v1523 = vadd.f32 %v122, %v1521
  %v1524 = vxor.u32 %v1523, 2147483648
  %v1525 = vmul.f32 %v1524, 1.442695
  %v1526 = vpow.pop %v1525
  %v1527 = vadd.f32 %v1526, 1.0
  %v1528 = vrcp.pop %v1527
  %v1529 = vmul.f32 1.0, %v1528
  %v1530 = vadd.f32 %v1516, %v231
  %v1532 = vrot.slane %v1530, 2
  %1533 = vrot.lane.b32.xlu0 %v1532, 64
  %v1534 = vpop.permute.xlu0 %1533
  %v1536 = vmul.f32 %v1529, %v1534
  %1538 = vrot.lane.b32.xlu0 %v1536, 64
  %v1539 = vpop.permute.xlu0 %1538
  %v1541 = vadd.f32 %v122, %v1539
  %v1542 = vtanh.pop %v1541
  %v1543 = vsub.f32 1.0, %v1529
  %1545 = vrot.lane.b32.xlu0 %v1542, 96
  %v1546 = vpop.permute.xlu0 %1545
  %v1548 = vmul.f32 %v1543, %v1546
  %v1549 = vrot.slane %v1420, 6
  %1550 = vrot.lane.b32.xlu0 %v1549, 32
  %v1551 = vpop.permute.xlu0 %1550
  %v1553 = vmul.f32 %v1529, %v1551
  %v1554 = vadd.f32 %v1548, %v1553
  %v1555 = vadd.f32 %v116, %v1516
  %v1556 = vxor.u32 %v1555, 2147483648
  %v1557 = vmul.f32 %v1556, 1.442695
  %v1558 = vpow.pop %v1557
  %v1559 = vadd.f32 %v1558, 1.0
  %v1560 = vrcp.pop %v1559
  %v1561 = vmul.f32 1.0, %v1560
  %v1562 = vadd.f32 %v118, %v1518
  %v1563 = vxor.u32 %v1562, 2147483648
  %v1564 = vmul.f32 %v1563, 1.442695
  %v1565 = vpow.pop %v1564
  %v1566 = vadd.f32 %v1565, 1.0
  %v1567 = vrcp.pop %v1566
  %v1568 = vmul.f32 1.0, %v1567
  %v1569 = vadd.f32 %v1518, %v229
  %1571 = vrot.lane.b32.xlu0 %v1569, 64
  %v1572 = vpop.permute.xlu0 %1571
  %v1574 = vmul.f32 %v1561, %v1572
  %1576 = vrot.lane.b32.xlu0 %v1574, 64
  %v1577 = vpop.permute.xlu0 %1576
  %v1579 = vadd.f32 %v118, %v1577
  %v1580 = vtanh.pop %v1579
  %v1581 = vsub.f32 1.0, %v1568
  %1583 = vrot.lane.b32.xlu0 %v1580, 96
  %v1584 = vpop.permute.xlu0 %1583
  %v1586 = vmul.f32 %v1581, %v1584
  %1587 = vrot.lane.b32.xlu0 %v1446, 96
  %v1588 = vpop.permute.xlu0 %1587
  %v1590 = vmul.f32 %v1568, %v1588
  %v1591 = vadd.f32 %v1586, %v1590
  %v1593 = vcombine.high %v1554, %v1554
  %v1595 = vunpack.c.l.s4 1983009808
  %v1596 = vunpack.c.0.s8 %v1595
  %v1597 = vlaneseq
  %v1598 = vshrl.u32 %v1597, 7
  %v1599 = vsub.s32 %v1596, %v1598
  %v1600 = vrot.slane %v1593, %v1599
  %v1601 = vcombine.high %v1600, %v1600
  %1602 = vrot.lane.b32.xlu0 %v1601, 32
  %v1603 = vpop.permute.xlu0 %1602
  %1605 = vst.msk [vmem:[%s5 + $0x6] sm:$0x3] %vm505, %v1603
  %v1608 = vunpack.c.l.s4 1983009808
  %v1609 = vunpack.c.0.s8 %v1608
  %v1610 = vlaneseq
  %v1611 = vshrl.u32 %v1610, 7
  %v1612 = vsub.s32 %v1609, %v1611
  %v1613 = vrot.slane %v1591, %v1612
  %1614 = vrot.lane.b32.xlu0 %v1613, 32
  %v1615 = vpop.permute.xlu0 %1614
  %1617 = vst.msk [vmem:[%s5] sm:$0x3] %vm518, %v1615
  // Predicated region
  $region22: #{copynet_forward.1} parent=0 // pred_check
    _
  $region23: #{copynet_forward.1} parent=0 // pred_check_branch
    %1619 = sbr.rel (0) target = $region25
  $region24: #{copynet_forward.1} parent=0 // pred_region
    _
  $region25: #{copynet_forward.1} parent=0 // pred_fallthru
    _
  // Predicated region
  $region26: #{copynet_forward.1} parent=0 // pred_check
    _
  $region27: #{copynet_forward.1} parent=0 // pred_check_branch
    %1621 = sbr.rel (0) target = $region29
  $region28: #{copynet_forward.1} parent=0 // pred_region
    _
  $region29: #{copynet_forward.1} parent=0 // pred_fallthru
    _

</llo_original>
